<compile_context>
chip_gen: v7x
topology: tpu7x:2x2x1
jax: 0.10.0
libtpu: 0.0.40
codegen_flags: <defaults>
</compile_context>

<pallas_src>
import functools

import jax
import jax.numpy as jnp
from jax.experimental import pallas as pl
from jax.experimental.pallas import tpu as pltpu

# ---------------- model config (small, DeepSeek-like decoder) ----------------
VOCAB = 64
DIM = 32
N_LAYERS = 2
N_HEADS = 2
HEAD_DIM = DIM // N_HEADS          # 16
HALF = HEAD_DIM // 2               # 8
INTER = 64                         # SwiGLU hidden size
MAX_SEQ = 16
ROPE_THETA = 10000.0
EPS = 1e-6
NEG_INF = -1e30

_VMEM = pl.BlockSpec(memory_space=pltpu.MemorySpace.VMEM)


# ------------------------- fused whole-forward kernel -------------------------
def _transformer_kernel(tok_ref, embed_ref, cosf_ref, sinf_ref, perm_ref,
                        mask_ref,
                        attn_norm_ref, wqkv_ref, wo_ref,
                        ffn_norm_ref, w13_ref, w2_ref,
                        final_norm_ref, head_ref,
                        o_ref, *, batch, seq):
    R = batch * seq
    scale = 1.0 / (HEAD_DIM ** 0.5)

    def bf16(x):
        return x.astype(jnp.bfloat16)

    def rmsnorm(x, w):  # x: [rows, DIM] f32, w: [1, DIM] f32
        var = jnp.mean(x * x, axis=-1, keepdims=True)
        return x * jax.lax.rsqrt(var + EPS) * w

    # ---- embedding: one-hot (iota == token) matmul on the MXU ----
    tok = tok_ref[...]                                            # [R, 1] int32
    vocab_iota = jax.lax.broadcasted_iota(jnp.int32, (R, VOCAB), 1)
    onehot = jnp.where(vocab_iota == tok, 1.0, 0.0)               # [R, VOCAB] f32
    h = jnp.dot(bf16(onehot), embed_ref[...],
                preferred_element_type=jnp.float32)               # [R, DIM] f32

    # ---- pre-tiled rotary tables / rotate-half permutation / fused mask ----
    cosf = cosf_ref[...]                                          # [R, 2*DIM] f32
    sinf = sinf_ref[...]                                          # [R, 2*DIM] f32
    perm = perm_ref[...]                                          # [2*DIM, 2*DIM] bf16
    mask = mask_ref[...]                                          # [R, R] f32 (batch-block + causal)

    # ---- decoder layers (statically unrolled; everything stays in VMEM) ----
    for l in range(N_LAYERS):
        # attention pre-norm + fused QKV projection
        xn = rmsnorm(h, attn_norm_ref[l])                         # [R, DIM]
        qkv = jnp.dot(bf16(xn), wqkv_ref[l],
                      preferred_element_type=jnp.float32)         # [R, 3*DIM]

        # RoPE on the fused Q|K slab in one shot (rotate_half via MXU matmul)
        qk = qkv[:, :2 * DIM]                                     # [R, 2*DIM]
        qk_rot = jnp.dot(bf16(qk), perm,
                         preferred_element_type=jnp.float32)      # rotate_half per head
        qk = qk * cosf + qk_rot * sinf
        v = qkv[:, 2 * DIM:]                                      # [R, DIM]

        # per-head attention over ALL batch rows at once ([R,R] scores)
        head_outs = []
        for hd in range(N_HEADS):
            c0 = hd * HEAD_DIM
            qh = bf16(qk[:, c0:c0 + HEAD_DIM])                    # [R, Dh]
            kh = bf16(qk[:, DIM + c0:DIM + c0 + HEAD_DIM])        # [R, Dh]
            vh = bf16(v[:, c0:c0 + HEAD_DIM])                     # [R, Dh]
            s = jnp.einsum('qd,kd->qk', qh, kh,
                           preferred_element_type=jnp.float32) * scale
            s = s + mask                                          # cross-batch + future -> -inf
            m = jnp.max(s, axis=-1, keepdims=True)
            p = jnp.exp(s - m)
            denom = jnp.sum(p, axis=-1, keepdims=True)
            p = p * pl.reciprocal(denom, approx=True)
            head_outs.append(jnp.dot(bf16(p), vh,
                                     preferred_element_type=jnp.float32))
        ao = jnp.concatenate(head_outs, axis=-1)                  # [R, DIM]

        # output projection + residual
        h = h + jnp.dot(bf16(ao), wo_ref[l],
                        preferred_element_type=jnp.float32)

        # SwiGLU FFN (fused W1|W3) + residual
        xn = rmsnorm(h, ffn_norm_ref[l])
        gu = jnp.dot(bf16(xn), w13_ref[l],
                     preferred_element_type=jnp.float32)          # [R, 2*INTER]
        g = gu[:, :INTER]
        u = gu[:, INTER:]
        a = g * jax.nn.sigmoid(g)                                 # SiLU
        h = h + jnp.dot(bf16(a * u), w2_ref[l],
                        preferred_element_type=jnp.float32)

    # ---- final norm + logits head on the last position of each sequence ----
    h_last = jnp.concatenate(
        [h[b * seq + seq - 1:b * seq + seq, :] for b in range(batch)], axis=0)  # [B, DIM]
    hn = rmsnorm(h_last, final_norm_ref[...])
    o_ref[...] = jnp.dot(bf16(hn), head_ref[...],
                         preferred_element_type=jnp.float32)          # [B, VOCAB]


# ------------------------------- wrapper (JAX) --------------------------------
def forward(params, tokens, start_pos=0):
    """tokens: [B, S] int32 -> logits of last position: [B, VOCAB]."""
    B, S = tokens.shape
    R = B * S
    tok = tokens.reshape(R, 1).astype(jnp.int32)

    # rotary cos/sin pre-tiled over (batch rows) x (Q|K, heads) -> [R, 2*DIM]
    cos = params['cos'][start_pos:start_pos + S]                 # [S, Dh]
    sin = params['sin'][start_pos:start_pos + S]
    cosf = jnp.tile(cos, (B, 2 * N_HEADS))                       # [R, 2*DIM]
    sinf = jnp.tile(sin, (B, 2 * N_HEADS))

    # combined batch-block + causal mask over flattened (b, s) rows
    r = jnp.arange(R, dtype=jnp.int32)
    b_idx = r // S
    s_idx = r % S
    ok = (b_idx[:, None] == b_idx[None, :]) & (s_idx[None, :] <= s_idx[:, None])
    mask = jnp.where(ok, 0.0, NEG_INF).astype(jnp.float32)       # [R, R]

    kern = functools.partial(_transformer_kernel, batch=B, seq=S)
    return pl.pallas_call(
        kern,
        out_shape=jax.ShapeDtypeStruct((B, VOCAB), jnp.float32),
        in_specs=[_VMEM] * 14,
        out_specs=_VMEM,
    )(tok, params['embed'], cosf, sinf, params['rope_perm'], mask,
      params['attn_norm'], params['wqkv'], params['wo'],
      params['ffn_norm'], params['w13'], params['w2'],
      params['final_norm'], params['head'])


def _rotate_half_perm(width):
    """Signed permutation P [width, width] s.t. (x @ P) == rotate_half per head."""
    i = jnp.arange(width)[:, None]
    j = jnp.arange(width)[None, :]
    jm = j % HEAD_DIM
    neg = (i == j + HALF) & (jm < HALF)        # out[j] = -x[j + half]
    pos = (j == i + HALF) & (jm >= HALF)       # out[j] = +x[j - half]
    return (jnp.where(pos, 1.0, 0.0) - jnp.where(neg, 1.0, 0.0)).astype(jnp.bfloat16)


def init_params(key):
    def nrm(k, shape, scale=0.02):
        return (scale * jax.random.normal(k, shape, dtype=jnp.float32)
                ).astype(jnp.bfloat16)

    k_embed, k_head, k_qkv, k_wo, k_w13, k_w2 = jax.random.split(key, 6)
    params = {
        # projection weights live in bf16 (native MXU input; halves weight DMA)
        'embed': nrm(k_embed, (VOCAB, DIM)),
        'head': nrm(k_head, (DIM, VOCAB)),
        'wqkv': nrm(k_qkv, (N_LAYERS, DIM, 3 * DIM)),
        'wo': nrm(k_wo, (N_LAYERS, DIM, DIM)),
        'w13': nrm(k_w13, (N_LAYERS, DIM, 2 * INTER)),
        'w2': nrm(k_w2, (N_LAYERS, INTER, DIM)),
        # norm weights stay f32
        'final_norm': jnp.ones((1, DIM), jnp.float32),
        'attn_norm': jnp.ones((N_LAYERS, 1, DIM), jnp.float32),
        'ffn_norm': jnp.ones((N_LAYERS, 1, DIM), jnp.float32),
        # constant rotate_half signed permutation for the fused Q|K slab
        'rope_perm': _rotate_half_perm(2 * DIM),
    }
    # rotary tables in half-rotation layout, duplicated to full head_dim
    inv = 1.0 / (ROPE_THETA ** (jnp.arange(0, HEAD_DIM, 2, dtype=jnp.float32) / HEAD_DIM))
    t = jnp.arange(MAX_SEQ, dtype=jnp.float32)
    ang = jnp.outer(t, inv)                                   # [MAX_SEQ, Dh//2]
    params['cos'] = jnp.concatenate([jnp.cos(ang), jnp.cos(ang)], axis=-1)
    params['sin'] = jnp.concatenate([jnp.sin(ang), jnp.sin(ang)], axis=-1)
    return params


if __name__ == "__main__":
    key = jax.random.PRNGKey(0)
    pkey, tkey = jax.random.split(key)
    params = init_params(pkey)
    tokens = jax.random.randint(tkey, (2, 8), 0, VOCAB, dtype=jnp.int32)

    logits = jax.jit(forward)(params, tokens)
    jax.block_until_ready(logits)
    assert logits.shape == (2, VOCAB), logits.shape
    assert bool(jnp.all(jnp.isfinite(logits)))
    print("KERNEL_OK")
</pallas_src>

<mosaic_0001>
module attributes {stable_mosaic.version = 11 : i64} {
  func.func @_transformer_kernel(%arg0: memref<16x1xi32, #tpu.memory_space<vmem>>, %arg1: memref<64x32xbf16, #tpu.memory_space<vmem>>, %arg2: memref<16x64xf32, #tpu.memory_space<vmem>>, %arg3: memref<16x64xf32, #tpu.memory_space<vmem>>, %arg4: memref<64x64xbf16, #tpu.memory_space<vmem>>, %arg5: memref<16x16xf32, #tpu.memory_space<vmem>>, %arg6: memref<2x1x32xf32, #tpu.memory_space<vmem>>, %arg7: memref<2x32x96xbf16, #tpu.memory_space<vmem>>, %arg8: memref<2x32x32xbf16, #tpu.memory_space<vmem>>, %arg9: memref<2x1x32xf32, #tpu.memory_space<vmem>>, %arg10: memref<2x32x128xbf16, #tpu.memory_space<vmem>>, %arg11: memref<2x64x32xbf16, #tpu.memory_space<vmem>>, %arg12: memref<1x32xf32, #tpu.memory_space<vmem>>, %arg13: memref<32x64xbf16, #tpu.memory_space<vmem>>, %arg14: memref<2x64xf32, #tpu.memory_space<vmem>>) attributes {dimension_semantics = [], scalar_prefetch = 0 : i64, scratch_operands = 0 : i64, tpu.core_type = #tpu.core_type<tc>} {
    %c0 = arith.constant 0 : index
    %c0_0 = arith.constant 0 : index
    %0 = vector.load %arg0[%c0, %c0_0] : memref<16x1xi32, #tpu.memory_space<vmem>>, vector<16x1xi32>
    %1 = tpu.iota {dimensions = array<i32: 1>} : vector<16x64xi32>
    %2 = vector.broadcast %0 : vector<16x1xi32> to vector<16x64xi32>
    %3 = arith.cmpi eq, %1, %2 : vector<16x64xi32>
    %cst = arith.constant 1.000000e+00 : f32
    %cst_1 = arith.constant 0.000000e+00 : f32
    %4 = vector.broadcast %cst : f32 to vector<16x64xf32>
    %5 = vector.broadcast %cst_1 : f32 to vector<16x64xf32>
    %6 = arith.select %3, %4, %5 : vector<16x64xi1>, vector<16x64xf32>
    %7 = arith.truncf %6 : vector<16x64xf32> to vector<16x64xbf16>
    %c0_2 = arith.constant 0 : index
    %c0_3 = arith.constant 0 : index
    %8 = vector.load %arg1[%c0_2, %c0_3] : memref<64x32xbf16, #tpu.memory_space<vmem>>, vector<64x32xbf16>
    %cst_4 = arith.constant dense<0.000000e+00> : vector<16x32xf32>
    %9 = tpu.matmul %7, %8, %cst_4 {dimension_numbers = #tpu.dot_dimension_numbers<[1], [0], [0], [1], [0, 0, 1, 1], [], []>} : vector<16x64xbf16>, vector<64x32xbf16>, vector<16x32xf32> -> vector<16x32xf32>
    %c0_5 = arith.constant 0 : index
    %c0_6 = arith.constant 0 : index
    %10 = vector.load %arg2[%c0_5, %c0_6] : memref<16x64xf32, #tpu.memory_space<vmem>>, vector<16x64xf32>
    %c0_7 = arith.constant 0 : index
    %c0_8 = arith.constant 0 : index
    %11 = vector.load %arg3[%c0_7, %c0_8] : memref<16x64xf32, #tpu.memory_space<vmem>>, vector<16x64xf32>
    %c0_9 = arith.constant 0 : index
    %c0_10 = arith.constant 0 : index
    %12 = vector.load %arg4[%c0_9, %c0_10] : memref<64x64xbf16, #tpu.memory_space<vmem>>, vector<64x64xbf16>
    %c0_11 = arith.constant 0 : index
    %c0_12 = arith.constant 0 : index
    %13 = vector.load %arg5[%c0_11, %c0_12] : memref<16x16xf32, #tpu.memory_space<vmem>>, vector<16x16xf32>
    %c0_13 = arith.constant 0 : index
    %c0_14 = arith.constant 0 : index
    %c0_15 = arith.constant 0 : index
    %14 = vector.load %arg6[%c0_13, %c0_14, %c0_15] : memref<2x1x32xf32, #tpu.memory_space<vmem>>, vector<1x1x32xf32>
    %15 = vector.shape_cast %14 : vector<1x1x32xf32> to vector<1x32xf32>
    %16 = arith.mulf %9, %9 : vector<16x32xf32>
    %cst_16 = arith.constant dense<0.000000e+00> : vector<16xf32>
    %17 = vector.multi_reduction <add>, %16, %cst_16 [1] : vector<16x32xf32> to vector<16xf32>
    %18 = vector.shape_cast %17 : vector<16xf32> to vector<16x1xf32>
    %cst_17 = arith.constant 3.200000e+01 : f32
    %19 = vector.broadcast %cst_17 : f32 to vector<16x1xf32>
    %20 = arith.divf %18, %19 : vector<16x1xf32>
    %cst_18 = arith.constant 9.99999997E-7 : f32
    %21 = vector.broadcast %cst_18 : f32 to vector<16x1xf32>
    %22 = arith.addf %20, %21 : vector<16x1xf32>
    %23 = math.rsqrt %22 : vector<16x1xf32>
    %24 = vector.broadcast %23 : vector<16x1xf32> to vector<16x32xf32>
    %25 = arith.mulf %9, %24 : vector<16x32xf32>
    %26 = vector.broadcast %15 : vector<1x32xf32> to vector<16x32xf32>
    %27 = arith.mulf %25, %26 : vector<16x32xf32>
    %28 = arith.truncf %27 : vector<16x32xf32> to vector<16x32xbf16>
    %c0_19 = arith.constant 0 : index
    %c0_20 = arith.constant 0 : index
    %c0_21 = arith.constant 0 : index
    %29 = vector.load %arg7[%c0_19, %c0_20, %c0_21] : memref<2x32x96xbf16, #tpu.memory_space<vmem>>, vector<1x32x96xbf16>
    %30 = vector.shape_cast %29 : vector<1x32x96xbf16> to vector<32x96xbf16>
    %cst_22 = arith.constant dense<0.000000e+00> : vector<16x96xf32>
    %31 = tpu.matmul %28, %30, %cst_22 {dimension_numbers = #tpu.dot_dimension_numbers<[1], [0], [0], [1], [0, 0, 1, 1], [], []>} : vector<16x32xbf16>, vector<32x96xbf16>, vector<16x96xf32> -> vector<16x96xf32>
    %32 = vector.extract_strided_slice %31 {offsets = [0, 0], sizes = [16, 64], strides = [1, 1]} : vector<16x96xf32> to vector<16x64xf32>
    %33 = arith.truncf %32 : vector<16x64xf32> to vector<16x64xbf16>
    %cst_23 = arith.constant dense<0.000000e+00> : vector<16x64xf32>
    %34 = tpu.matmul %33, %12, %cst_23 {dimension_numbers = #tpu.dot_dimension_numbers<[1], [0], [0], [1], [0, 0, 1, 1], [], []>} : vector<16x64xbf16>, vector<64x64xbf16>, vector<16x64xf32> -> vector<16x64xf32>
    %35 = arith.mulf %32, %10 : vector<16x64xf32>
    %36 = arith.mulf %34, %11 : vector<16x64xf32>
    %37 = arith.addf %35, %36 : vector<16x64xf32>
    %38 = vector.extract_strided_slice %31 {offsets = [0, 64], sizes = [16, 32], strides = [1, 1]} : vector<16x96xf32> to vector<16x32xf32>
    %39 = vector.extract_strided_slice %37 {offsets = [0, 0], sizes = [16, 16], strides = [1, 1]} : vector<16x64xf32> to vector<16x16xf32>
    %40 = arith.truncf %39 : vector<16x16xf32> to vector<16x16xbf16>
    %41 = vector.extract_strided_slice %37 {offsets = [0, 32], sizes = [16, 16], strides = [1, 1]} : vector<16x64xf32> to vector<16x16xf32>
    %42 = arith.truncf %41 : vector<16x16xf32> to vector<16x16xbf16>
    %43 = vector.extract_strided_slice %38 {offsets = [0, 0], sizes = [16, 16], strides = [1, 1]} : vector<16x32xf32> to vector<16x16xf32>
    %44 = arith.truncf %43 : vector<16x16xf32> to vector<16x16xbf16>
    "tpu.trace_start"() <{level = 10 : i32, message = "qd,kd->qk"}> : () -> ()
    %cst_24 = arith.constant dense<0.000000e+00> : vector<16x16xf32>
    %45 = tpu.matmul %40, %42, %cst_24 {dimension_numbers = #tpu.dot_dimension_numbers<[1], [1], [0], [0], [0, 0, 1, 0], [], []>} : vector<16x16xbf16>, vector<16x16xbf16>, vector<16x16xf32> -> vector<16x16xf32>
    "tpu.trace_stop"() : () -> ()
    %cst_25 = arith.constant 2.500000e-01 : f32
    %46 = vector.broadcast %cst_25 : f32 to vector<16x16xf32>
    %47 = arith.mulf %45, %46 : vector<16x16xf32>
    %48 = arith.addf %47, %13 : vector<16x16xf32>
    %cst_26 = arith.constant dense<0xFF800000> : vector<16xf32>
    %49 = vector.multi_reduction <maximumf>, %48, %cst_26 [1] : vector<16x16xf32> to vector<16xf32>
    %50 = vector.shape_cast %49 : vector<16xf32> to vector<16x1xf32>
    %51 = vector.broadcast %50 : vector<16x1xf32> to vector<16x16xf32>
    %52 = arith.subf %48, %51 : vector<16x16xf32>
    %53 = math.exp %52 : vector<16x16xf32>
    %cst_27 = arith.constant dense<0.000000e+00> : vector<16xf32>
    %54 = vector.multi_reduction <add>, %53, %cst_27 [1] : vector<16x16xf32> to vector<16xf32>
    %55 = vector.shape_cast %54 : vector<16xf32> to vector<16x1xf32>
    %56 = tpu.reciprocal %55 {approx = true} : vector<16x1xf32> -> vector<16x1xf32>
    %57 = vector.broadcast %56 : vector<16x1xf32> to vector<16x16xf32>
    %58 = arith.mulf %53, %57 : vector<16x16xf32>
    %59 = arith.truncf %58 : vector<16x16xf32> to vector<16x16xbf16>
    %cst_28 = arith.constant dense<0.000000e+00> : vector<16x16xf32>
    %60 = tpu.matmul %59, %44, %cst_28 {dimension_numbers = #tpu.dot_dimension_numbers<[1], [0], [0], [1], [0, 0, 1, 1], [], []>} : vector<16x16xbf16>, vector<16x16xbf16>, vector<16x16xf32> -> vector<16x16xf32>
    %61 = vector.extract_strided_slice %37 {offsets = [0, 16], sizes = [16, 16], strides = [1, 1]} : vector<16x64xf32> to vector<16x16xf32>
    %62 = arith.truncf %61 : vector<16x16xf32> to vector<16x16xbf16>
    %63 = vector.extract_strided_slice %37 {offsets = [0, 48], sizes = [16, 16], strides = [1, 1]} : vector<16x64xf32> to vector<16x16xf32>
    %64 = arith.truncf %63 : vector<16x16xf32> to vector<16x16xbf16>
    %65 = vector.extract_strided_slice %38 {offsets = [0, 16], sizes = [16, 16], strides = [1, 1]} : vector<16x32xf32> to vector<16x16xf32>
    %66 = arith.truncf %65 : vector<16x16xf32> to vector<16x16xbf16>
    "tpu.trace_start"() <{level = 10 : i32, message = "qd,kd->qk"}> : () -> ()
    %cst_29 = arith.constant dense<0.000000e+00> : vector<16x16xf32>
    %67 = tpu.matmul %62, %64, %cst_29 {dimension_numbers = #tpu.dot_dimension_numbers<[1], [1], [0], [0], [0, 0, 1, 0], [], []>} : vector<16x16xbf16>, vector<16x16xbf16>, vector<16x16xf32> -> vector<16x16xf32>
    "tpu.trace_stop"() : () -> ()
    %cst_30 = arith.constant 2.500000e-01 : f32
    %68 = vector.broadcast %cst_30 : f32 to vector<16x16xf32>
    %69 = arith.mulf %67, %68 : vector<16x16xf32>
    %70 = arith.addf %69, %13 : vector<16x16xf32>
    %cst_31 = arith.constant dense<0xFF800000> : vector<16xf32>
    %71 = vector.multi_reduction <maximumf>, %70, %cst_31 [1] : vector<16x16xf32> to vector<16xf32>
    %72 = vector.shape_cast %71 : vector<16xf32> to vector<16x1xf32>
    %73 = vector.broadcast %72 : vector<16x1xf32> to vector<16x16xf32>
    %74 = arith.subf %70, %73 : vector<16x16xf32>
    %75 = math.exp %74 : vector<16x16xf32>
    %cst_32 = arith.constant dense<0.000000e+00> : vector<16xf32>
    %76 = vector.multi_reduction <add>, %75, %cst_32 [1] : vector<16x16xf32> to vector<16xf32>
    %77 = vector.shape_cast %76 : vector<16xf32> to vector<16x1xf32>
    %78 = tpu.reciprocal %77 {approx = true} : vector<16x1xf32> -> vector<16x1xf32>
    %79 = vector.broadcast %78 : vector<16x1xf32> to vector<16x16xf32>
    %80 = arith.mulf %75, %79 : vector<16x16xf32>
    %81 = arith.truncf %80 : vector<16x16xf32> to vector<16x16xbf16>
    %cst_33 = arith.constant dense<0.000000e+00> : vector<16x16xf32>
    %82 = tpu.matmul %81, %66, %cst_33 {dimension_numbers = #tpu.dot_dimension_numbers<[1], [0], [0], [1], [0, 0, 1, 1], [], []>} : vector<16x16xbf16>, vector<16x16xbf16>, vector<16x16xf32> -> vector<16x16xf32>
    %83 = tpu.concatenate %60, %82 in 1 : vector<16x16xf32>, vector<16x16xf32> -> vector<16x32xf32>
    %84 = arith.truncf %83 : vector<16x32xf32> to vector<16x32xbf16>
    %c0_34 = arith.constant 0 : index
    %c0_35 = arith.constant 0 : index
    %c0_36 = arith.constant 0 : index
    %85 = vector.load %arg8[%c0_34, %c0_35, %c0_36] : memref<2x32x32xbf16, #tpu.memory_space<vmem>>, vector<1x32x32xbf16>
    %86 = vector.shape_cast %85 : vector<1x32x32xbf16> to vector<32x32xbf16>
    %cst_37 = arith.constant dense<0.000000e+00> : vector<16x32xf32>
    %87 = tpu.matmul %84, %86, %cst_37 {dimension_numbers = #tpu.dot_dimension_numbers<[1], [0], [0], [1], [0, 0, 1, 1], [], []>} : vector<16x32xbf16>, vector<32x32xbf16>, vector<16x32xf32> -> vector<16x32xf32>
    %88 = arith.addf %9, %87 : vector<16x32xf32>
    %c0_38 = arith.constant 0 : index
    %c0_39 = arith.constant 0 : index
    %c0_40 = arith.constant 0 : index
    %89 = vector.load %arg9[%c0_38, %c0_39, %c0_40] : memref<2x1x32xf32, #tpu.memory_space<vmem>>, vector<1x1x32xf32>
    %90 = vector.shape_cast %89 : vector<1x1x32xf32> to vector<1x32xf32>
    %91 = arith.mulf %88, %88 : vector<16x32xf32>
    %cst_41 = arith.constant dense<0.000000e+00> : vector<16xf32>
    %92 = vector.multi_reduction <add>, %91, %cst_41 [1] : vector<16x32xf32> to vector<16xf32>
    %93 = vector.shape_cast %92 : vector<16xf32> to vector<16x1xf32>
    %cst_42 = arith.constant 3.200000e+01 : f32
    %94 = vector.broadcast %cst_42 : f32 to vector<16x1xf32>
    %95 = arith.divf %93, %94 : vector<16x1xf32>
    %cst_43 = arith.constant 9.99999997E-7 : f32
    %96 = vector.broadcast %cst_43 : f32 to vector<16x1xf32>
    %97 = arith.addf %95, %96 : vector<16x1xf32>
    %98 = math.rsqrt %97 : vector<16x1xf32>
    %99 = vector.broadcast %98 : vector<16x1xf32> to vector<16x32xf32>
    %100 = arith.mulf %88, %99 : vector<16x32xf32>
    %101 = vector.broadcast %90 : vector<1x32xf32> to vector<16x32xf32>
    %102 = arith.mulf %100, %101 : vector<16x32xf32>
    %103 = arith.truncf %102 : vector<16x32xf32> to vector<16x32xbf16>
    %c0_44 = arith.constant 0 : index
    %c0_45 = arith.constant 0 : index
    %c0_46 = arith.constant 0 : index
    %104 = vector.load %arg10[%c0_44, %c0_45, %c0_46] : memref<2x32x128xbf16, #tpu.memory_space<vmem>>, vector<1x32x128xbf16>
    %105 = vector.shape_cast %104 : vector<1x32x128xbf16> to vector<32x128xbf16>
    %cst_47 = arith.constant dense<0.000000e+00> : vector<16x128xf32>
    %106 = tpu.matmul %103, %105, %cst_47 {dimension_numbers = #tpu.dot_dimension_numbers<[1], [0], [0], [1], [0, 0, 1, 1], [], []>} : vector<16x32xbf16>, vector<32x128xbf16>, vector<16x128xf32> -> vector<16x128xf32>
    %107 = vector.extract_strided_slice %106 {offsets = [0, 0], sizes = [16, 64], strides = [1, 1]} : vector<16x128xf32> to vector<16x64xf32>
    %108 = vector.extract_strided_slice %106 {offsets = [0, 64], sizes = [16, 64], strides = [1, 1]} : vector<16x128xf32> to vector<16x64xf32>
    %109 = arith.negf %107 : vector<16x64xf32>
    %110 = math.exp %109 : vector<16x64xf32>
    %cst_48 = arith.constant 1.000000e+00 : f32
    %111 = vector.broadcast %cst_48 : f32 to vector<16x64xf32>
    %112 = arith.addf %111, %110 : vector<16x64xf32>
    %113 = arith.divf %111, %112 : vector<16x64xf32>
    %114 = arith.mulf %107, %113 : vector<16x64xf32>
    %115 = arith.mulf %114, %108 : vector<16x64xf32>
    %116 = arith.truncf %115 : vector<16x64xf32> to vector<16x64xbf16>
    %c0_49 = arith.constant 0 : index
    %c0_50 = arith.constant 0 : index
    %c0_51 = arith.constant 0 : index
    %117 = vector.load %arg11[%c0_49, %c0_50, %c0_51] : memref<2x64x32xbf16, #tpu.memory_space<vmem>>, vector<1x64x32xbf16>
    %118 = vector.shape_cast %117 : vector<1x64x32xbf16> to vector<64x32xbf16>
    %cst_52 = arith.constant dense<0.000000e+00> : vector<16x32xf32>
    %119 = tpu.matmul %116, %118, %cst_52 {dimension_numbers = #tpu.dot_dimension_numbers<[1], [0], [0], [1], [0, 0, 1, 1], [], []>} : vector<16x64xbf16>, vector<64x32xbf16>, vector<16x32xf32> -> vector<16x32xf32>
    %120 = arith.addf %88, %119 : vector<16x32xf32>
    %c1 = arith.constant 1 : index
    %c0_53 = arith.constant 0 : index
    %c0_54 = arith.constant 0 : index
    %121 = vector.load %arg6[%c1, %c0_53, %c0_54] : memref<2x1x32xf32, #tpu.memory_space<vmem>>, vector<1x1x32xf32>
    %122 = vector.shape_cast %121 : vector<1x1x32xf32> to vector<1x32xf32>
    %123 = arith.mulf %120, %120 : vector<16x32xf32>
    %cst_55 = arith.constant dense<0.000000e+00> : vector<16xf32>
    %124 = vector.multi_reduction <add>, %123, %cst_55 [1] : vector<16x32xf32> to vector<16xf32>
    %125 = vector.shape_cast %124 : vector<16xf32> to vector<16x1xf32>
    %cst_56 = arith.constant 3.200000e+01 : f32
    %126 = vector.broadcast %cst_56 : f32 to vector<16x1xf32>
    %127 = arith.divf %125, %126 : vector<16x1xf32>
    %cst_57 = arith.constant 9.99999997E-7 : f32
    %128 = vector.broadcast %cst_57 : f32 to vector<16x1xf32>
    %129 = arith.addf %127, %128 : vector<16x1xf32>
    %130 = math.rsqrt %129 : vector<16x1xf32>
    %131 = vector.broadcast %130 : vector<16x1xf32> to vector<16x32xf32>
    %132 = arith.mulf %120, %131 : vector<16x32xf32>
    %133 = vector.broadcast %122 : vector<1x32xf32> to vector<16x32xf32>
    %134 = arith.mulf %132, %133 : vector<16x32xf32>
    %135 = arith.truncf %134 : vector<16x32xf32> to vector<16x32xbf16>
    %c1_58 = arith.constant 1 : index
    %c0_59 = arith.constant 0 : index
    %c0_60 = arith.constant 0 : index
    %136 = vector.load %arg7[%c1_58, %c0_59, %c0_60] : memref<2x32x96xbf16, #tpu.memory_space<vmem>>, vector<1x32x96xbf16>
    %137 = vector.shape_cast %136 : vector<1x32x96xbf16> to vector<32x96xbf16>
    %cst_61 = arith.constant dense<0.000000e+00> : vector<16x96xf32>
    %138 = tpu.matmul %135, %137, %cst_61 {dimension_numbers = #tpu.dot_dimension_numbers<[1], [0], [0], [1], [0, 0, 1, 1], [], []>} : vector<16x32xbf16>, vector<32x96xbf16>, vector<16x96xf32> -> vector<16x96xf32>
    %139 = vector.extract_strided_slice %138 {offsets = [0, 0], sizes = [16, 64], strides = [1, 1]} : vector<16x96xf32> to vector<16x64xf32>
    %140 = arith.truncf %139 : vector<16x64xf32> to vector<16x64xbf16>
    %cst_62 = arith.constant dense<0.000000e+00> : vector<16x64xf32>
    %141 = tpu.matmul %140, %12, %cst_62 {dimension_numbers = #tpu.dot_dimension_numbers<[1], [0], [0], [1], [0, 0, 1, 1], [], []>} : vector<16x64xbf16>, vector<64x64xbf16>, vector<16x64xf32> -> vector<16x64xf32>
    %142 = arith.mulf %139, %10 : vector<16x64xf32>
    %143 = arith.mulf %141, %11 : vector<16x64xf32>
    %144 = arith.addf %142, %143 : vector<16x64xf32>
    %145 = vector.extract_strided_slice %138 {offsets = [0, 64], sizes = [16, 32], strides = [1, 1]} : vector<16x96xf32> to vector<16x32xf32>
    %146 = vector.extract_strided_slice %144 {offsets = [0, 0], sizes = [16, 16], strides = [1, 1]} : vector<16x64xf32> to vector<16x16xf32>
    %147 = arith.truncf %146 : vector<16x16xf32> to vector<16x16xbf16>
    %148 = vector.extract_strided_slice %144 {offsets = [0, 32], sizes = [16, 16], strides = [1, 1]} : vector<16x64xf32> to vector<16x16xf32>
    %149 = arith.truncf %148 : vector<16x16xf32> to vector<16x16xbf16>
    %150 = vector.extract_strided_slice %145 {offsets = [0, 0], sizes = [16, 16], strides = [1, 1]} : vector<16x32xf32> to vector<16x16xf32>
    %151 = arith.truncf %150 : vector<16x16xf32> to vector<16x16xbf16>
    "tpu.trace_start"() <{level = 10 : i32, message = "qd,kd->qk"}> : () -> ()
    %cst_63 = arith.constant dense<0.000000e+00> : vector<16x16xf32>
    %152 = tpu.matmul %147, %149, %cst_63 {dimension_numbers = #tpu.dot_dimension_numbers<[1], [1], [0], [0], [0, 0, 1, 0], [], []>} : vector<16x16xbf16>, vector<16x16xbf16>, vector<16x16xf32> -> vector<16x16xf32>
    "tpu.trace_stop"() : () -> ()
    %cst_64 = arith.constant 2.500000e-01 : f32
    %153 = vector.broadcast %cst_64 : f32 to vector<16x16xf32>
    %154 = arith.mulf %152, %153 : vector<16x16xf32>
    %155 = arith.addf %154, %13 : vector<16x16xf32>
    %cst_65 = arith.constant dense<0xFF800000> : vector<16xf32>
    %156 = vector.multi_reduction <maximumf>, %155, %cst_65 [1] : vector<16x16xf32> to vector<16xf32>
    %157 = vector.shape_cast %156 : vector<16xf32> to vector<16x1xf32>
    %158 = vector.broadcast %157 : vector<16x1xf32> to vector<16x16xf32>
    %159 = arith.subf %155, %158 : vector<16x16xf32>
    %160 = math.exp %159 : vector<16x16xf32>
    %cst_66 = arith.constant dense<0.000000e+00> : vector<16xf32>
    %161 = vector.multi_reduction <add>, %160, %cst_66 [1] : vector<16x16xf32> to vector<16xf32>
    %162 = vector.shape_cast %161 : vector<16xf32> to vector<16x1xf32>
    %163 = tpu.reciprocal %162 {approx = true} : vector<16x1xf32> -> vector<16x1xf32>
    %164 = vector.broadcast %163 : vector<16x1xf32> to vector<16x16xf32>
    %165 = arith.mulf %160, %164 : vector<16x16xf32>
    %166 = arith.truncf %165 : vector<16x16xf32> to vector<16x16xbf16>
    %cst_67 = arith.constant dense<0.000000e+00> : vector<16x16xf32>
    %167 = tpu.matmul %166, %151, %cst_67 {dimension_numbers = #tpu.dot_dimension_numbers<[1], [0], [0], [1], [0, 0, 1, 1], [], []>} : vector<16x16xbf16>, vector<16x16xbf16>, vector<16x16xf32> -> vector<16x16xf32>
    %168 = vector.extract_strided_slice %144 {offsets = [0, 16], sizes = [16, 16], strides = [1, 1]} : vector<16x64xf32> to vector<16x16xf32>
    %169 = arith.truncf %168 : vector<16x16xf32> to vector<16x16xbf16>
    %170 = vector.extract_strided_slice %144 {offsets = [0, 48], sizes = [16, 16], strides = [1, 1]} : vector<16x64xf32> to vector<16x16xf32>
    %171 = arith.truncf %170 : vector<16x16xf32> to vector<16x16xbf16>
    %172 = vector.extract_strided_slice %145 {offsets = [0, 16], sizes = [16, 16], strides = [1, 1]} : vector<16x32xf32> to vector<16x16xf32>
    %173 = arith.truncf %172 : vector<16x16xf32> to vector<16x16xbf16>
    "tpu.trace_start"() <{level = 10 : i32, message = "qd,kd->qk"}> : () -> ()
    %cst_68 = arith.constant dense<0.000000e+00> : vector<16x16xf32>
    %174 = tpu.matmul %169, %171, %cst_68 {dimension_numbers = #tpu.dot_dimension_numbers<[1], [1], [0], [0], [0, 0, 1, 0], [], []>} : vector<16x16xbf16>, vector<16x16xbf16>, vector<16x16xf32> -> vector<16x16xf32>
    "tpu.trace_stop"() : () -> ()
    %cst_69 = arith.constant 2.500000e-01 : f32
    %175 = vector.broadcast %cst_69 : f32 to vector<16x16xf32>
    %176 = arith.mulf %174, %175 : vector<16x16xf32>
    %177 = arith.addf %176, %13 : vector<16x16xf32>
    %cst_70 = arith.constant dense<0xFF800000> : vector<16xf32>
    %178 = vector.multi_reduction <maximumf>, %177, %cst_70 [1] : vector<16x16xf32> to vector<16xf32>
    %179 = vector.shape_cast %178 : vector<16xf32> to vector<16x1xf32>
    %180 = vector.broadcast %179 : vector<16x1xf32> to vector<16x16xf32>
    %181 = arith.subf %177, %180 : vector<16x16xf32>
    %182 = math.exp %181 : vector<16x16xf32>
    %cst_71 = arith.constant dense<0.000000e+00> : vector<16xf32>
    %183 = vector.multi_reduction <add>, %182, %cst_71 [1] : vector<16x16xf32> to vector<16xf32>
    %184 = vector.shape_cast %183 : vector<16xf32> to vector<16x1xf32>
    %185 = tpu.reciprocal %184 {approx = true} : vector<16x1xf32> -> vector<16x1xf32>
    %186 = vector.broadcast %185 : vector<16x1xf32> to vector<16x16xf32>
    %187 = arith.mulf %182, %186 : vector<16x16xf32>
    %188 = arith.truncf %187 : vector<16x16xf32> to vector<16x16xbf16>
    %cst_72 = arith.constant dense<0.000000e+00> : vector<16x16xf32>
    %189 = tpu.matmul %188, %173, %cst_72 {dimension_numbers = #tpu.dot_dimension_numbers<[1], [0], [0], [1], [0, 0, 1, 1], [], []>} : vector<16x16xbf16>, vector<16x16xbf16>, vector<16x16xf32> -> vector<16x16xf32>
    %190 = tpu.concatenate %167, %189 in 1 : vector<16x16xf32>, vector<16x16xf32> -> vector<16x32xf32>
    %191 = arith.truncf %190 : vector<16x32xf32> to vector<16x32xbf16>
    %c1_73 = arith.constant 1 : index
    %c0_74 = arith.constant 0 : index
    %c0_75 = arith.constant 0 : index
    %192 = vector.load %arg8[%c1_73, %c0_74, %c0_75] : memref<2x32x32xbf16, #tpu.memory_space<vmem>>, vector<1x32x32xbf16>
    %193 = vector.shape_cast %192 : vector<1x32x32xbf16> to vector<32x32xbf16>
    %cst_76 = arith.constant dense<0.000000e+00> : vector<16x32xf32>
    %194 = tpu.matmul %191, %193, %cst_76 {dimension_numbers = #tpu.dot_dimension_numbers<[1], [0], [0], [1], [0, 0, 1, 1], [], []>} : vector<16x32xbf16>, vector<32x32xbf16>, vector<16x32xf32> -> vector<16x32xf32>
    %195 = arith.addf %120, %194 : vector<16x32xf32>
    %c1_77 = arith.constant 1 : index
    %c0_78 = arith.constant 0 : index
    %c0_79 = arith.constant 0 : index
    %196 = vector.load %arg9[%c1_77, %c0_78, %c0_79] : memref<2x1x32xf32, #tpu.memory_space<vmem>>, vector<1x1x32xf32>
    %197 = vector.shape_cast %196 : vector<1x1x32xf32> to vector<1x32xf32>
    %198 = arith.mulf %195, %195 : vector<16x32xf32>
    %cst_80 = arith.constant dense<0.000000e+00> : vector<16xf32>
    %199 = vector.multi_reduction <add>, %198, %cst_80 [1] : vector<16x32xf32> to vector<16xf32>
    %200 = vector.shape_cast %199 : vector<16xf32> to vector<16x1xf32>
    %cst_81 = arith.constant 3.200000e+01 : f32
    %201 = vector.broadcast %cst_81 : f32 to vector<16x1xf32>
    %202 = arith.divf %200, %201 : vector<16x1xf32>
    %cst_82 = arith.constant 9.99999997E-7 : f32
    %203 = vector.broadcast %cst_82 : f32 to vector<16x1xf32>
    %204 = arith.addf %202, %203 : vector<16x1xf32>
    %205 = math.rsqrt %204 : vector<16x1xf32>
    %206 = vector.broadcast %205 : vector<16x1xf32> to vector<16x32xf32>
    %207 = arith.mulf %195, %206 : vector<16x32xf32>
    %208 = vector.broadcast %197 : vector<1x32xf32> to vector<16x32xf32>
    %209 = arith.mulf %207, %208 : vector<16x32xf32>
    %210 = arith.truncf %209 : vector<16x32xf32> to vector<16x32xbf16>
    %c1_83 = arith.constant 1 : index
    %c0_84 = arith.constant 0 : index
    %c0_85 = arith.constant 0 : index
    %211 = vector.load %arg10[%c1_83, %c0_84, %c0_85] : memref<2x32x128xbf16, #tpu.memory_space<vmem>>, vector<1x32x128xbf16>
    %212 = vector.shape_cast %211 : vector<1x32x128xbf16> to vector<32x128xbf16>
    %cst_86 = arith.constant dense<0.000000e+00> : vector<16x128xf32>
    %213 = tpu.matmul %210, %212, %cst_86 {dimension_numbers = #tpu.dot_dimension_numbers<[1], [0], [0], [1], [0, 0, 1, 1], [], []>} : vector<16x32xbf16>, vector<32x128xbf16>, vector<16x128xf32> -> vector<16x128xf32>
    %214 = vector.extract_strided_slice %213 {offsets = [0, 0], sizes = [16, 64], strides = [1, 1]} : vector<16x128xf32> to vector<16x64xf32>
    %215 = vector.extract_strided_slice %213 {offsets = [0, 64], sizes = [16, 64], strides = [1, 1]} : vector<16x128xf32> to vector<16x64xf32>
    %216 = arith.negf %214 : vector<16x64xf32>
    %217 = math.exp %216 : vector<16x64xf32>
    %cst_87 = arith.constant 1.000000e+00 : f32
    %218 = vector.broadcast %cst_87 : f32 to vector<16x64xf32>
    %219 = arith.addf %218, %217 : vector<16x64xf32>
    %220 = arith.divf %218, %219 : vector<16x64xf32>
    %221 = arith.mulf %214, %220 : vector<16x64xf32>
    %222 = arith.mulf %221, %215 : vector<16x64xf32>
    %223 = arith.truncf %222 : vector<16x64xf32> to vector<16x64xbf16>
    %c1_88 = arith.constant 1 : index
    %c0_89 = arith.constant 0 : index
    %c0_90 = arith.constant 0 : index
    %224 = vector.load %arg11[%c1_88, %c0_89, %c0_90] : memref<2x64x32xbf16, #tpu.memory_space<vmem>>, vector<1x64x32xbf16>
    %225 = vector.shape_cast %224 : vector<1x64x32xbf16> to vector<64x32xbf16>
    %cst_91 = arith.constant dense<0.000000e+00> : vector<16x32xf32>
    %226 = tpu.matmul %223, %225, %cst_91 {dimension_numbers = #tpu.dot_dimension_numbers<[1], [0], [0], [1], [0, 0, 1, 1], [], []>} : vector<16x64xbf16>, vector<64x32xbf16>, vector<16x32xf32> -> vector<16x32xf32>
    %227 = arith.addf %195, %226 : vector<16x32xf32>
    %228 = vector.extract_strided_slice %227 {offsets = [7, 0], sizes = [1, 32], strides = [1, 1]} : vector<16x32xf32> to vector<1x32xf32>
    %229 = vector.extract_strided_slice %227 {offsets = [15, 0], sizes = [1, 32], strides = [1, 1]} : vector<16x32xf32> to vector<1x32xf32>
    %230 = tpu.concatenate %228, %229 in 0 : vector<1x32xf32>, vector<1x32xf32> -> vector<2x32xf32>
    %c0_92 = arith.constant 0 : index
    %c0_93 = arith.constant 0 : index
    %231 = vector.load %arg12[%c0_92, %c0_93] : memref<1x32xf32, #tpu.memory_space<vmem>>, vector<1x32xf32>
    %232 = arith.mulf %230, %230 : vector<2x32xf32>
    %cst_94 = arith.constant dense<0.000000e+00> : vector<2xf32>
    %233 = vector.multi_reduction <add>, %232, %cst_94 [1] : vector<2x32xf32> to vector<2xf32>
    %234 = vector.shape_cast %233 : vector<2xf32> to vector<2x1xf32>
    %cst_95 = arith.constant 3.200000e+01 : f32
    %235 = vector.broadcast %cst_95 : f32 to vector<2x1xf32>
    %236 = arith.divf %234, %235 : vector<2x1xf32>
    %cst_96 = arith.constant 9.99999997E-7 : f32
    %237 = vector.broadcast %cst_96 : f32 to vector<2x1xf32>
    %238 = arith.addf %236, %237 : vector<2x1xf32>
    %239 = math.rsqrt %238 : vector<2x1xf32>
    %240 = vector.broadcast %239 : vector<2x1xf32> to vector<2x32xf32>
    %241 = arith.mulf %230, %240 : vector<2x32xf32>
    %242 = vector.broadcast %231 : vector<1x32xf32> to vector<2x32xf32>
    %243 = arith.mulf %241, %242 : vector<2x32xf32>
    %244 = arith.truncf %243 : vector<2x32xf32> to vector<2x32xbf16>
    %c0_97 = arith.constant 0 : index
    %c0_98 = arith.constant 0 : index
    %245 = vector.load %arg13[%c0_97, %c0_98] : memref<32x64xbf16, #tpu.memory_space<vmem>>, vector<32x64xbf16>
    %cst_99 = arith.constant dense<0.000000e+00> : vector<2x64xf32>
    %246 = tpu.matmul %244, %245, %cst_99 {dimension_numbers = #tpu.dot_dimension_numbers<[1], [0], [0], [1], [0, 0, 1, 1], [], []>} : vector<2x32xbf16>, vector<32x64xbf16>, vector<2x64xf32> -> vector<2x64xf32>
    %c0_100 = arith.constant 0 : index
    %c0_101 = arith.constant 0 : index
    %247 = vector.load %arg14[%c0_100, %c0_101] : memref<2x64xf32, #tpu.memory_space<vmem>>, vector<2x64xf32>
    tpu.vector_store %arg14[%c0_100, %c0_101], %246 {strides = array<i32>} : memref<2x64xf32, #tpu.memory_space<vmem>>, vector<2x64xf32>,
    return
  }
}

</mosaic_0001>

<llo_original>
// kernel: tile.18
$region0: #{tile.18}
  #allocation0 [shape = 's32[1]{0}', space=sflag, size = 0x4, scoped, tag = 'scoped memory for tile.18']
  %s0 = inlined_call_operand.vmem [shape: f32[8,16], index: 0, kind: input, shape index: {}]
  %s1 = inlined_call_operand.vmem [shape: f32[2,8,4,16], index: 1, kind: output, shape index: {}]
  // Predicated region
  $region2: #{tile.18} parent=0 // pred_check
    _
  $region3: #{tile.18} parent=0 // pred_check_branch
    %3 = sbr.rel (0) target = $region5
  $region4: #{tile.18} parent=0 // pred_region
    _
  $region5: #{tile.18} parent=0 // pred_fallthru
    _
  %v4 = vld [vmem:[%s0] ss:$0 sm:$0xff]
  %5 = vst [vmem:[%s1] sm:$0xf] %v4
  %s6 = scalar_lea.vmem %s1, 32
  %7 = vst [vmem:[%s6] sm:$0xf] %v4
  %s8 = scalar_lea.vmem %s0, 1
  %v9 = vld [vmem:[%s8] ss:$0 sm:$0xff]
  %s10 = scalar_lea.vmem %s1, 4
  %11 = vst [vmem:[%s10] sm:$0xf] %v9
  %s12 = scalar_lea.vmem %s1, 36
  %13 = vst [vmem:[%s12] sm:$0xf] %v9
  %s14 = scalar_lea.vmem %s0, 2
  %v15 = vld [vmem:[%s14] ss:$0 sm:$0xff]
  %s16 = scalar_lea.vmem %s1, 8
  %17 = vst [vmem:[%s16] sm:$0xf] %v15
  %s18 = scalar_lea.vmem %s1, 40
  %19 = vst [vmem:[%s18] sm:$0xf] %v15
  %s20 = scalar_lea.vmem %s0, 3
  %v21 = vld [vmem:[%s20] ss:$0 sm:$0xff]
  %s22 = scalar_lea.vmem %s1, 12
  %23 = vst [vmem:[%s22] sm:$0xf] %v21
  %s24 = scalar_lea.vmem %s1, 44
  %25 = vst [vmem:[%s24] sm:$0xf] %v21
  %s26 = scalar_lea.vmem %s0, 4
  %v27 = vld [vmem:[%s26] ss:$0 sm:$0xff]
  %s28 = scalar_lea.vmem %s1, 16
  %29 = vst [vmem:[%s28] sm:$0xf] %v27
  %s30 = scalar_lea.vmem %s1, 48
  %31 = vst [vmem:[%s30] sm:$0xf] %v27
  %s32 = scalar_lea.vmem %s0, 5
  %v33 = vld [vmem:[%s32] ss:$0 sm:$0xff]
  %s34 = scalar_lea.vmem %s1, 20
  %35 = vst [vmem:[%s34] sm:$0xf] %v33
  %s36 = scalar_lea.vmem %s1, 52
  %37 = vst [vmem:[%s36] sm:$0xf] %v33
  %s38 = scalar_lea.vmem %s0, 6
  %v39 = vld [vmem:[%s38] ss:$0 sm:$0xff]
  %s40 = scalar_lea.vmem %s1, 24
  %41 = vst [vmem:[%s40] sm:$0xf] %v39
  %s42 = scalar_lea.vmem %s1, 56
  %43 = vst [vmem:[%s42] sm:$0xf] %v39
  %s44 = scalar_lea.vmem %s0, 7
  %v45 = vld [vmem:[%s44] ss:$0 sm:$0xff]
  %s46 = scalar_lea.vmem %s1, 28
  %47 = vst [vmem:[%s46] sm:$0xf] %v45
  %s48 = scalar_lea.vmem %s1, 60
  %49 = vst [vmem:[%s48] sm:$0xf] %v45

// kernel: tile.19
$region0: #{tile.19}
  %s0 = inlined_call_operand.vmem [shape: f32[2,8,4,16], index: 0, kind: input, shape index: {}]
  %s1 = inlined_call_operand.vmem [shape: f32[16,64], index: 1, kind: output, shape index: {}]
  $region1: #{tile.19} parent=0
    #allocation0 [shape = 'u8[65536]{0}', space=vmem, size = 0x10000, scoped, tag = 'scoped mem for input reshape']
    %s3 = sshllo.u32 0, 4
    %s4 = smul.addr 4, 15
    %s5 = scalar_lea.vmem %s0, %s4
    %v6 = vld [vmem:[%s5] sm:%s3]
    %s7 = scalar_lea.vmem [#allocation0], 120
    %8 = vst [vmem:[%s7] sm:%s3] %v6
    %s9 = smul.addr 4, 14
    %s10 = scalar_lea.vmem %s0, %s9
    %v11 = vld [vmem:[%s10] sm:%s3]
    %s12 = scalar_lea.vmem [#allocation0], 112
    %13 = vst [vmem:[%s12] sm:%s3] %v11
    %s14 = smul.addr 4, 13
    %s15 = scalar_lea.vmem %s0, %s14
    %v16 = vld [vmem:[%s15] sm:%s3]
    %s17 = scalar_lea.vmem [#allocation0], 104
    %18 = vst [vmem:[%s17] sm:%s3] %v16
    %s19 = smul.addr 4, 12
    %s20 = scalar_lea.vmem %s0, %s19
    %v21 = vld [vmem:[%s20] sm:%s3]
    %s22 = scalar_lea.vmem [#allocation0], 96
    %23 = vst [vmem:[%s22] sm:%s3] %v21
    %s24 = smul.addr 4, 11
    %s25 = scalar_lea.vmem %s0, %s24
    %v26 = vld [vmem:[%s25] sm:%s3]
    %s27 = scalar_lea.vmem [#allocation0], 88
    %28 = vst [vmem:[%s27] sm:%s3] %v26
    %s29 = smul.addr 4, 10
    %s30 = scalar_lea.vmem %s0, %s29
    %v31 = vld [vmem:[%s30] sm:%s3]
    %s32 = scalar_lea.vmem [#allocation0], 80
    %33 = vst [vmem:[%s32] sm:%s3] %v31
    %s34 = smul.addr 4, 9
    %s35 = scalar_lea.vmem %s0, %s34
    %v36 = vld [vmem:[%s35] sm:%s3]
    %s37 = scalar_lea.vmem [#allocation0], 72
    %38 = vst [vmem:[%s37] sm:%s3] %v36
    %s39 = smul.addr 4, 8
    %s40 = scalar_lea.vmem %s0, %s39
    %v41 = vld [vmem:[%s40] sm:%s3]
    %s42 = scalar_lea.vmem [#allocation0], 64
    %43 = vst [vmem:[%s42] sm:%s3] %v41
    %s44 = smul.addr 4, 7
    %s45 = scalar_lea.vmem %s0, %s44
    %v46 = vld [vmem:[%s45] sm:%s3]
    %s47 = scalar_lea.vmem [#allocation0], 56
    %48 = vst [vmem:[%s47] sm:%s3] %v46
    %s49 = smul.addr 4, 6
    %s50 = scalar_lea.vmem %s0, %s49
    %v51 = vld [vmem:[%s50] sm:%s3]
    %s52 = scalar_lea.vmem [#allocation0], 48
    %53 = vst [vmem:[%s52] sm:%s3] %v51
    %s54 = smul.addr 4, 5
    %s55 = scalar_lea.vmem %s0, %s54
    %v56 = vld [vmem:[%s55] sm:%s3]
    %s57 = scalar_lea.vmem [#allocation0], 40
    %58 = vst [vmem:[%s57] sm:%s3] %v56
    %s59 = smul.addr 4, 4
    %s60 = scalar_lea.vmem %s0, %s59
    %v61 = vld [vmem:[%s60] sm:%s3]
    %s62 = scalar_lea.vmem [#allocation0], 32
    %63 = vst [vmem:[%s62] sm:%s3] %v61
    %s64 = smul.addr 4, 3
    %s65 = scalar_lea.vmem %s0, %s64
    %v66 = vld [vmem:[%s65] sm:%s3]
    %s67 = scalar_lea.vmem [#allocation0], 24
    %68 = vst [vmem:[%s67] sm:%s3] %v66
    %s69 = smul.addr 4, 2
    %s70 = scalar_lea.vmem %s0, %s69
    %v71 = vld [vmem:[%s70] sm:%s3]
    %s72 = scalar_lea.vmem [#allocation0], 16
    %73 = vst [vmem:[%s72] sm:%s3] %v71
    %s74 = scalar_lea.vmem %s0, 4
    %v75 = vld [vmem:[%s74] sm:%s3]
    %s76 = scalar_lea.vmem [#allocation0], 8
    %77 = vst [vmem:[%s76] sm:%s3] %v75
    %v78 = vld [vmem:[%s0] sm:%s3]
    %79 = vst [vmem:[#allocation0] sm:%s3] %v78
    %v80 = vld [vmem:[#allocation0] ss:$8 sm:$0xf]
    %v81 = vld [vmem:[#allocation0] ss:$8 sm:$0xf0]
    %vm82 = vcmask 1047556
    %v83 = vsel %vm82, %v81, %v80
    %vm84 = vcmask 130048
    %85 = vst.msk [vmem:[%s1] sm:$0xff] %vm84, %v83
    %s86 = scalar_lea.vmem [#allocation0], 64
    %v87 = vld [vmem:[%s86] ss:$8 sm:$0xf]
    %s88 = scalar_lea.vmem [#allocation0], 64
    %v89 = vld [vmem:[%s88] ss:$8 sm:$0xf0]
    %vm90 = vcmask 1047556
    %v91 = vsel %vm90, %v89, %v87
    %vm92 = vcmask 130048
    %s93 = scalar_lea.vmem %s1, 8
    %94 = vst.msk [vmem:[%s93] sm:$0xff] %vm92, %v91
    %s95 = scalar_lea.vmem [#allocation0], 3
    %v96 = vld [vmem:[%s95] ss:$8 sm:$0xf]
    %s97 = scalar_lea.vmem [#allocation0], 3
    %v98 = vld [vmem:[%s97] ss:$8 sm:$0xf0]
    %vm99 = vcmask 1047556
    %v100 = vsel %vm99, %v98, %v96
    %101 = vrot.lane.b32.xlu0 %v100, 48
    %v102 = vpop.permute.xlu0 %101
    %vm103 = vcmask 523648
    %104 = vst.msk [vmem:[%s1] sm:$0xff] %vm103, %v102
    %s105 = scalar_lea.vmem [#allocation0], 67
    %v106 = vld [vmem:[%s105] ss:$8 sm:$0xf]
    %s107 = scalar_lea.vmem [#allocation0], 67
    %v108 = vld [vmem:[%s107] ss:$8 sm:$0xf0]
    %vm109 = vcmask 1047556
    %v110 = vsel %vm109, %v108, %v106
    %111 = vrot.lane.b32.xlu0 %v110, 48
    %v112 = vpop.permute.xlu0 %111
    %vm113 = vcmask 523648
    %s114 = scalar_lea.vmem %s1, 8
    %115 = vst.msk [vmem:[%s114] sm:$0xff] %vm113, %v112
    %s116 = scalar_lea.vmem [#allocation0], 2
    %v117 = vld [vmem:[%s116] ss:$8 sm:$0xf]
    %s118 = scalar_lea.vmem [#allocation0], 2
    %v119 = vld [vmem:[%s118] ss:$8 sm:$0xf0]
    %vm120 = vcmask 1047556
    %v121 = vsel %vm120, %v119, %v117
    %122 = vrot.lane.b32.xlu0 %v121, 32
    %v123 = vpop.permute.xlu0 %122
    %vm124 = vcmask 392448
    %125 = vst.msk [vmem:[%s1] sm:$0xff] %vm124, %v123
    %s126 = scalar_lea.vmem [#allocation0], 66
    %v127 = vld [vmem:[%s126] ss:$8 sm:$0xf]
    %s128 = scalar_lea.vmem [#allocation0], 66
    %v129 = vld [vmem:[%s128] ss:$8 sm:$0xf0]
    %vm130 = vcmask 1047556
    %v131 = vsel %vm130, %v129, %v127
    %132 = vrot.lane.b32.xlu0 %v131, 32
    %v133 = vpop.permute.xlu0 %132
    %vm134 = vcmask 392448
    %s135 = scalar_lea.vmem %s1, 8
    %136 = vst.msk [vmem:[%s135] sm:$0xff] %vm134, %v133
    %s137 = scalar_lea.vmem [#allocation0], 1
    %v138 = vld [vmem:[%s137] ss:$8 sm:$0xf]
    %s139 = scalar_lea.vmem [#allocation0], 1
    %v140 = vld [vmem:[%s139] ss:$8 sm:$0xf0]
    %vm141 = vcmask 1047556
    %v142 = vsel %vm141, %v140, %v138
    %143 = vrot.lane.b32.xlu0 %v142, 16
    %v144 = vpop.permute.xlu0 %143
    %vm145 = vcmask 261248
    %146 = vst.msk [vmem:[%s1] sm:$0xff] %vm145, %v144
    %s147 = scalar_lea.vmem [#allocation0], 65
    %v148 = vld [vmem:[%s147] ss:$8 sm:$0xf]
    %s149 = scalar_lea.vmem [#allocation0], 65
    %v150 = vld [vmem:[%s149] ss:$8 sm:$0xf0]
    %vm151 = vcmask 1047556
    %v152 = vsel %vm151, %v150, %v148
    %153 = vrot.lane.b32.xlu0 %v152, 16
    %v154 = vpop.permute.xlu0 %153
    %vm155 = vcmask 261248
    %s156 = scalar_lea.vmem %s1, 8
    %157 = vst.msk [vmem:[%s156] sm:$0xff] %vm155, %v154

// kernel: forward.1
$region0: #{forward.1}
  #allocation0 [shape = 'u32[]', space=smem, size = 0x4, offset = 0x4, fixed_abs, tag = 'smem constant byte address 0x4 - core index']
  #allocation1 [shape = 'u32[144,128]{1,0:T(1,128)}', space=vmem, size = 0x12000, scoped, tag = 'internal scratch']
  %s0 = inlined_call_operand.vmem [shape: s32[16,1], index: 0, kind: input, shape index: {}]
  %s1 = inlined_call_operand.vmem [shape: bf16[64,32], index: 1, kind: input, shape index: {}]
  %s2 = inlined_call_operand.vmem [shape: f32[16,64], index: 2, kind: input, shape index: {}]
  %s3 = inlined_call_operand.vmem [shape: f32[16,64], index: 3, kind: input, shape index: {}]
  %s4 = inlined_call_operand.vmem [shape: bf16[64,64], index: 4, kind: input, shape index: {}]
  %s5 = inlined_call_operand.vmem [shape: f32[16,16], index: 5, kind: input, shape index: {}]
  %s6 = inlined_call_operand.vmem [shape: f32[2,1,32], index: 6, kind: input, shape index: {}]
  %s7 = inlined_call_operand.vmem [shape: bf16[2,32,96], index: 7, kind: input, shape index: {}]
  %s8 = inlined_call_operand.vmem [shape: bf16[2,32,32], index: 8, kind: input, shape index: {}]
  %s9 = inlined_call_operand.vmem [shape: f32[2,1,32], index: 9, kind: input, shape index: {}]
  %s10 = inlined_call_operand.vmem [shape: bf16[2,32,128], index: 10, kind: input, shape index: {}]
  %s11 = inlined_call_operand.vmem [shape: bf16[2,64,32], index: 11, kind: input, shape index: {}]
  %s12 = inlined_call_operand.vmem [shape: f32[1,32], index: 12, kind: input, shape index: {}]
  %s13 = inlined_call_operand.vmem [shape: bf16[32,64], index: 13, kind: input, shape index: {}]
  %s14 = inlined_call_operand.hbm [shape: f32[2,64], index: 14, kind: output, shape index: {}]
  %s15 = sld [smem:[#allocation0]]
  $region66: #{forward.1} parent=0
    _
  %s17 = ssub.s32 1, %s15
  %s18 = scalar_select 0, %s17, %s15
  $region1: #{forward.1} parent=0
    #allocation2 [shape = 'u8[1024]{0}', space=vmem, size = 0x400, scoped, tag = 'output window, operand 0, single buffered']
    #allocation3 [shape = 's32[1]{0}', space=sflag, size = 0x4, scoped, tag = 'scoped memory for forward.1']
    %19 = vsyncpa [#allocation3], 0
    // Predicated region
    $region2: #{forward.1} parent=1 // pred_check
      _
    $region3: #{forward.1} parent=1 // pred_check_branch
      %21 = sbr.rel (0) target = $region5
    $region4: #{forward.1} parent=1 // pred_region
      _
    $region5: #{forward.1} parent=1 // pred_fallthru
      _
    // Predicated region
    $region6: #{forward.1} parent=1 // pred_check
      _
    $region7: #{forward.1} parent=1 // pred_check_branch
      %23 = sbr.rel (0) target = $region9
    $region8: #{forward.1} parent=1 // pred_region
      _
    $region9: #{forward.1} parent=1 // pred_fallthru
      _
    // Predicated region
    $region10: #{forward.1} parent=1 // pred_check
      _
    $region11: #{forward.1} parent=1 // pred_check_branch
      %25 = sbr.rel (0) target = $region13
    $region12: #{forward.1} parent=1 // pred_region
      _
    $region13: #{forward.1} parent=1 // pred_fallthru
      _
    // Predicated region
    $region14: #{forward.1} parent=1 // pred_check
      _
    $region15: #{forward.1} parent=1 // pred_check_branch
      %27 = sbr.rel (0) target = $region17
    $region16: #{forward.1} parent=1 // pred_region
      _
    $region17: #{forward.1} parent=1 // pred_fallthru
      _
    // Predicated region
    $region18: #{forward.1} parent=1 // pred_check
      _
    $region19: #{forward.1} parent=1 // pred_check_branch
      %29 = sbr.rel (0) target = $region21
    $region20: #{forward.1} parent=1 // pred_region
      _
    $region21: #{forward.1} parent=1 // pred_fallthru
      _
    // Predicated region
    $region22: #{forward.1} parent=1 // pred_check
      _
    $region23: #{forward.1} parent=1 // pred_check_branch
      %31 = sbr.rel (0) target = $region25
    $region24: #{forward.1} parent=1 // pred_region
      _
    $region25: #{forward.1} parent=1 // pred_fallthru
      _
    // Predicated region
    $region26: #{forward.1} parent=1 // pred_check
      _
    $region27: #{forward.1} parent=1 // pred_check_branch
      %33 = sbr.rel (0) target = $region29
    $region28: #{forward.1} parent=1 // pred_region
      _
    $region29: #{forward.1} parent=1 // pred_fallthru
      _
    // Predicated region
    $region30: #{forward.1} parent=1 // pred_check
      _
    $region31: #{forward.1} parent=1 // pred_check_branch
      %35 = sbr.rel (0) target = $region33
    $region32: #{forward.1} parent=1 // pred_region
      _
    $region33: #{forward.1} parent=1 // pred_fallthru
      _
    // Predicated region
    $region34: #{forward.1} parent=1 // pred_check
      _
    $region35: #{forward.1} parent=1 // pred_check_branch
      %37 = sbr.rel (0) target = $region37
    $region36: #{forward.1} parent=1 // pred_region
      _
    $region37: #{forward.1} parent=1 // pred_fallthru
      _
    // Predicated region
    $region38: #{forward.1} parent=1 // pred_check
      _
    $region39: #{forward.1} parent=1 // pred_check_branch
      %39 = sbr.rel (0) target = $region41
    $region40: #{forward.1} parent=1 // pred_region
      _
    $region41: #{forward.1} parent=1 // pred_fallthru
      _
    // Predicated region
    $region42: #{forward.1} parent=1 // pred_check
      _
    $region43: #{forward.1} parent=1 // pred_check_branch
      %41 = sbr.rel (0) target = $region45
    $region44: #{forward.1} parent=1 // pred_region
      _
    $region45: #{forward.1} parent=1 // pred_fallthru
      _
    // Predicated region
    $region46: #{forward.1} parent=1 // pred_check
      _
    $region47: #{forward.1} parent=1 // pred_check_branch
      %43 = sbr.rel (0) target = $region49
    $region48: #{forward.1} parent=1 // pred_region
      _
    $region49: #{forward.1} parent=1 // pred_fallthru
      _
    // Predicated region
    $region50: #{forward.1} parent=1 // pred_check
      _
    $region51: #{forward.1} parent=1 // pred_check_branch
      %45 = sbr.rel (0) target = $region53
    $region52: #{forward.1} parent=1 // pred_region
      _
    $region53: #{forward.1} parent=1 // pred_fallthru
      _
    // Predicated region
    $region54: #{forward.1} parent=1 // pred_check
      _
    $region55: #{forward.1} parent=1 // pred_check_branch
      %47 = sbr.rel (0) target = $region57
    $region56: #{forward.1} parent=1 // pred_region
      _
    $region57: #{forward.1} parent=1 // pred_fallthru
      _
    %v49 = vld [vmem:[%s0] sm:$0xff]
    %v50 = vld [vmem:[%s0 + $0x8] sm:$0xff]
    %v51 = vlaneseq
    %v52 = vand.u32 %v51, 127
    %53 = vset.pattern.permute.xlu0 0
    %54 = vperm.xlu0 %53, %v49
    %v55 = vpop.permute.xlu0 %54
    %56 = vset.pattern.permute.xlu0 0
    %57 = vperm.xlu0 %56, %v50
    %v58 = vpop.permute.xlu0 %57
    %vm59 = vcmp.eq.s32.totalorder %v52, %v55
    %vm60 = vcmp.eq.s32.totalorder %v52, %v58
    %v61 = vsel %vm59, 1.0, 0.0
    %v62 = vsel %vm60, 1.0, 0.0
    %v63 = vpack.c.bf16 %v62, %v61
    %v64 = vld [vmem:[%s1] sm:$0xf]
    %v65 = vld [vmem:[%s1 + $0x4] sm:$0xf]
    %v66 = vld [vmem:[%s1 + $0x8] sm:$0xf]
    %v67 = vld [vmem:[%s1 + $0xc] sm:$0xf]
    %v68 = vld [vmem:[%s1 + $0x10] sm:$0xf]
    %v69 = vld [vmem:[%s1 + $0x14] sm:$0xf]
    %v70 = vld [vmem:[%s1 + $0x18] sm:$0xf]
    %v71 = vld [vmem:[%s1 + $0x1c] sm:$0xf]
    %v80 = vunpack.c.l.b16 %v64
    %v81 = vunpack.c.l.b16 %v65
    %v82 = vunpack.c.l.b16 %v66
    %v83 = vunpack.c.l.b16 %v67
    %v84 = vunpack.c.l.b16 %v68
    %v85 = vunpack.c.l.b16 %v69
    %v86 = vunpack.c.l.b16 %v70
    %v87 = vunpack.c.l.b16 %v71
    %v88 = vpack.c.b16 %v81, %v80
    %v89 = vpack.c.b16 %v83, %v82
    %v90 = vpack.c.b16 %v85, %v84
    %v91 = vpack.c.b16 %v87, %v86
    %vm96 = vcmask 523264
    %v98 = vsel %vm96, %v63, 0
    %100 = vmatprep.subr.bf16.mxu0 0
    %101 = vmatpush1.bf16.msra.mxu0 %v88
    %102 = vmatprep.subr.bf16.mxu0 0
    %103 = vmatpush1.bf16.msra.mxu0 %v89
    %104 = vmatprep.subr.bf16.mxu0 0
    %105 = vmatpush1.bf16.msra.mxu0 %v90
    %106 = vmatprep.subr.bf16.mxu0 0
    %107 = vmatpush1.bf16.msra.mxu0 %v91
    %108 = vmatprep.subr.bf16.mxu0 0
    %109 = vmatpush1.bf16.msra.mxu0 0
    %110 = vmatprep.subr.bf16.mxu0 0
    %111 = vmatpush1.bf16.msra.mxu0 0
    %112 = vmatprep.subr.bf16.mxu0 0
    %113 = vmatpush1.bf16.msra.mxu0 0
    %114 = vmatprep.subr.bf16.mxu0 0
    %115 = vmatpush1.bf16.msra.mxu0 0
    %116 = vmatprep.subr.bf16.mxu0 0
    %117 = vmatpush1.bf16.msra.mxu0 0
    %118 = vmatprep.subr.bf16.mxu0 0
    %119 = vmatpush1.bf16.msra.mxu0 0
    %120 = vmatprep.subr.bf16.mxu0 0
    %121 = vmatpush1.bf16.msra.mxu0 0
    %122 = vmatprep.subr.bf16.mxu0 0
    %123 = vmatpush1.bf16.msra.mxu0 0
    %124 = vmatprep.subr.bf16.mxu0 0
    %125 = vmatpush1.bf16.msra.mxu0 0
    %126 = vmatprep.subr.bf16.mxu0 0
    %127 = vmatpush1.bf16.msra.mxu0 0
    %128 = vmatprep.subr.bf16.mxu0 0
    %129 = vmatpush1.bf16.msra.mxu0 0
    %130 = vmatprep.subr.bf16.mxu0 0
    %131 = vmatpush1.bf16.msra.mxu0 0
    %132 = vmatprep.mubr.bf16.mxu0 0
    %133 = vmatmul.mubr.bf16.gmra.mrb[0].mxu0 %v98
    %v134 = vpop.f32.mrb[0].mxu0
    %v135 = vadd.f32 0.0, %v134
    %v136 = vpop.f32.mrb[0].mxu0
    %v137 = vpop.f32.mrb[0].mxu0
    %v138 = vadd.f32 0.0, %v137
    %v139 = vpop.f32.mrb[0].mxu0
    %140 = vdwg.mxu0
    %v141 = vld [vmem:[%s2] sm:$0xff]
    %v142 = vld [vmem:[%s2 + $0x8] sm:$0xff]
    %v143 = vld [vmem:[%s3] sm:$0xff]
    %v144 = vld [vmem:[%s3 + $0x8] sm:$0xff]
    %v145 = vld [vmem:[%s4] sm:$0xf]
    %v146 = vld [vmem:[%s4 + $0x4] sm:$0xf]
    %v147 = vld [vmem:[%s4 + $0x8] sm:$0xf]
    %v148 = vld [vmem:[%s4 + $0xc] sm:$0xf]
    %v149 = vld [vmem:[%s4 + $0x10] sm:$0xf]
    %v150 = vld [vmem:[%s4 + $0x14] sm:$0xf]
    %v151 = vld [vmem:[%s4 + $0x18] sm:$0xf]
    %v152 = vld [vmem:[%s4 + $0x1c] sm:$0xf]
    %v153 = vld [vmem:[%s5] sm:$0xff]
    %v154 = vld [vmem:[%s5 + $0x8] sm:$0xff]
    %v155 = vld [vmem:[%s6] sm:$0x1]
    %v156 = vmul.f32 %v135, %v135
    %v157 = vmul.f32 %v138, %v138
    %vm158 = vcmask 261120
    %v159 = vsel %vm158, %v156, 0.0
    %160 = vadd.xlane.f32.xlu0 %v159
    %v161 = vpop.xlane.xlu0 %160
    %v162 = vsel %vm158, %v157, 0.0
    %163 = vadd.xlane.f32.xlu0 %v162
    %v164 = vpop.xlane.xlu0 %163
    %v165 = vrcp.pop 32.0
    %v166 = vmul.f32 %v161, %v165
    %v167 = vmul.f32 %v164, %v165
    %v168 = vadd.f32 %v166, 1e-06
    %v169 = vadd.f32 %v167, 1e-06
    %v170 = vrsqrt.pop %v168
    %v171 = vrsqrt.pop %v169
    %v172 = vmul.f32 %v135, %v170
    %v173 = vmul.f32 %v138, %v171
    %v175 = vlaneseq
    %v176 = vshrl.u32 %v175, 7
    %v177 = vsub.s32 0, %v176
    %v178 = vrot.slane %v155, %v177
    %v180 = vmul.f32 %v172, %v178
    %v181 = vmul.f32 %v173, %v178
    %v182 = vpack.c.bf16 %v181, %v180
    %v183 = vld [vmem:[%s7] sm:$0xf]
    %v184 = vld [vmem:[%s7 + $0x4] sm:$0xf]
    %v185 = vld [vmem:[%s7 + $0x8] sm:$0xf]
    %v186 = vld [vmem:[%s7 + $0xc] sm:$0xf]
    %v191 = vunpack.c.l.b16 %v183
    %v192 = vunpack.c.l.b16 %v184
    %v193 = vunpack.c.l.b16 %v185
    %v194 = vunpack.c.l.b16 %v186
    %v195 = vpack.c.b16 %v192, %v191
    %v196 = vpack.c.b16 %v194, %v193
    %v200 = vsel %vm158, %v182, 0
    %202 = vmatprep.subr.bf16.mxu0 0
    %203 = vmatpush1.bf16.msra.mxu0 %v195
    %204 = vmatprep.subr.bf16.mxu0 0
    %205 = vmatpush1.bf16.msra.mxu0 %v196
    %206 = vmatprep.subr.bf16.mxu0 0
    %207 = vmatpush1.bf16.msra.mxu0 0
    %208 = vmatprep.subr.bf16.mxu0 0
    %209 = vmatpush1.bf16.msra.mxu0 0
    %210 = vmatprep.subr.bf16.mxu0 0
    %211 = vmatpush1.bf16.msra.mxu0 0
    %212 = vmatprep.subr.bf16.mxu0 0
    %213 = vmatpush1.bf16.msra.mxu0 0
    %214 = vmatprep.subr.bf16.mxu0 0
    %215 = vmatpush1.bf16.msra.mxu0 0
    %216 = vmatprep.subr.bf16.mxu0 0
    %217 = vmatpush1.bf16.msra.mxu0 0
    %218 = vmatprep.subr.bf16.mxu0 0
    %219 = vmatpush1.bf16.msra.mxu0 0
    %220 = vmatprep.subr.bf16.mxu0 0
    %221 = vmatpush1.bf16.msra.mxu0 0
    %222 = vmatprep.subr.bf16.mxu0 0
    %223 = vmatpush1.bf16.msra.mxu0 0
    %224 = vmatprep.subr.bf16.mxu0 0
    %225 = vmatpush1.bf16.msra.mxu0 0
    %226 = vmatprep.subr.bf16.mxu0 0
    %227 = vmatpush1.bf16.msra.mxu0 0
    %228 = vmatprep.subr.bf16.mxu0 0
    %229 = vmatpush1.bf16.msra.mxu0 0
    %230 = vmatprep.subr.bf16.mxu0 0
    %231 = vmatpush1.bf16.msra.mxu0 0
    %232 = vmatprep.subr.bf16.mxu0 0
    %233 = vmatpush1.bf16.msra.mxu0 0
    %234 = vmatprep.mubr.bf16.mxu0 0
    %235 = vmatmul.mubr.bf16.gmra.mrb[0].mxu0 %v200
    %v236 = vpop.f32.mrb[0].mxu0
    %v237 = vadd.f32 0.0, %v236
    %v238 = vpop.f32.mrb[0].mxu0
    %v239 = vpop.f32.mrb[0].mxu0
    %v240 = vadd.f32 0.0, %v239
    %v241 = vpop.f32.mrb[0].mxu0
    %242 = vdwg.mxu0
    %v243 = vpack.c.bf16 %v240, %v237
    %v252 = vunpack.c.l.b16 %v145
    %v253 = vunpack.c.l.b16 %v146
    %v254 = vunpack.c.l.b16 %v147
    %v255 = vunpack.c.l.b16 %v148
    %v256 = vunpack.c.l.b16 %v149
    %v257 = vunpack.c.l.b16 %v150
    %v258 = vunpack.c.l.b16 %v151
    %v259 = vunpack.c.l.b16 %v152
    %v260 = vpack.c.b16 %v253, %v252
    %v261 = vpack.c.b16 %v255, %v254
    %v262 = vpack.c.b16 %v257, %v256
    %v263 = vpack.c.b16 %v259, %v258
    %v269 = vsel %vm96, %v243, 0
    %271 = vmatprep.subr.bf16.mxu0 0
    %272 = vmatpush1.bf16.msra.mxu0 %v260
    %273 = vmatprep.subr.bf16.mxu0 0
    %274 = vmatpush1.bf16.msra.mxu0 %v261
    %275 = vmatprep.subr.bf16.mxu0 0
    %276 = vmatpush1.bf16.msra.mxu0 %v262
    %277 = vmatprep.subr.bf16.mxu0 0
    %278 = vmatpush1.bf16.msra.mxu0 %v263
    %279 = vmatprep.subr.bf16.mxu0 0
    %280 = vmatpush1.bf16.msra.mxu0 0
    %281 = vmatprep.subr.bf16.mxu0 0
    %282 = vmatpush1.bf16.msra.mxu0 0
    %283 = vmatprep.subr.bf16.mxu0 0
    %284 = vmatpush1.bf16.msra.mxu0 0
    %285 = vmatprep.subr.bf16.mxu0 0
    %286 = vmatpush1.bf16.msra.mxu0 0
    %287 = vmatprep.subr.bf16.mxu0 0
    %288 = vmatpush1.bf16.msra.mxu0 0
    %289 = vmatprep.subr.bf16.mxu0 0
    %290 = vmatpush1.bf16.msra.mxu0 0
    %291 = vmatprep.subr.bf16.mxu0 0
    %292 = vmatpush1.bf16.msra.mxu0 0
    %293 = vmatprep.subr.bf16.mxu0 0
    %294 = vmatpush1.bf16.msra.mxu0 0
    %295 = vmatprep.subr.bf16.mxu0 0
    %296 = vmatpush1.bf16.msra.mxu0 0
    %297 = vmatprep.subr.bf16.mxu0 0
    %298 = vmatpush1.bf16.msra.mxu0 0
    %299 = vmatprep.subr.bf16.mxu0 0
    %300 = vmatpush1.bf16.msra.mxu0 0
    %301 = vmatprep.subr.bf16.mxu0 0
    %302 = vmatpush1.bf16.msra.mxu0 0
    %303 = vmatprep.mubr.bf16.mxu0 0
    %304 = vmatmul.mubr.bf16.gmra.mrb[0].mxu0 %v269
    %v305 = vpop.f32.mrb[0].mxu0
    %v306 = vadd.f32 0.0, %v305
    %v307 = vpop.f32.mrb[0].mxu0
    %v308 = vpop.f32.mrb[0].mxu0
    %v309 = vadd.f32 0.0, %v308
    %v310 = vpop.f32.mrb[0].mxu0
    %311 = vdwg.mxu0
    %v312 = vmul.f32 %v237, %v141
    %v313 = vmul.f32 %v240, %v142
    %v314 = vmul.f32 %v306, %v143
    %v315 = vmul.f32 %v309, %v144
    %v316 = vadd.f32 %v312, %v314
    %v317 = vadd.f32 %v313, %v315
    %v318 = vpack.c.bf16 %v317, %v316
    %320 = vrot.lane.b32.xlu0 %v318, 96
    %v321 = vpop.permute.xlu0 %320
    %vm322 = vcmask 130048
    %v324 = vsel %vm322, %v318, 0
    %v327 = vsel %vm322, %v321, 0
    %329 = vmatprep.subr.bf16.mxu0 0
    %330 = vmatpush1.bf16.xpose.msra.mxu0 %v327
    %331 = vmatprep.subr.bf16.mxu0 0
    %332 = vmatpush1.bf16.xpose.msra.mxu0 0
    %333 = vmatprep.subr.bf16.mxu0 0
    %334 = vmatpush1.bf16.xpose.msra.mxu0 0
    %335 = vmatprep.subr.bf16.mxu0 0
    %336 = vmatpush1.bf16.xpose.msra.mxu0 0
    %337 = vmatprep.subr.bf16.mxu0 0
    %338 = vmatpush1.bf16.xpose.msra.mxu0 0
    %339 = vmatprep.subr.bf16.mxu0 0
    %340 = vmatpush1.bf16.xpose.msra.mxu0 0
    %341 = vmatprep.subr.bf16.mxu0 0
    %342 = vmatpush1.bf16.xpose.msra.mxu0 0
    %343 = vmatprep.subr.bf16.mxu0 0
    %344 = vmatpush1.bf16.xpose.msra.mxu0 0
    %345 = vmatprep.subr.bf16.mxu0 0
    %346 = vmatpush1.bf16.xpose.msra.mxu0 0
    %347 = vmatprep.subr.bf16.mxu0 0
    %348 = vmatpush1.bf16.xpose.msra.mxu0 0
    %349 = vmatprep.subr.bf16.mxu0 0
    %350 = vmatpush1.bf16.xpose.msra.mxu0 0
    %351 = vmatprep.subr.bf16.mxu0 0
    %352 = vmatpush1.bf16.xpose.msra.mxu0 0
    %353 = vmatprep.subr.bf16.mxu0 0
    %354 = vmatpush1.bf16.xpose.msra.mxu0 0
    %355 = vmatprep.subr.bf16.mxu0 0
    %356 = vmatpush1.bf16.xpose.msra.mxu0 0
    %357 = vmatprep.subr.bf16.mxu0 0
    %358 = vmatpush1.bf16.xpose.msra.mxu0 0
    %359 = vmatprep.subr.bf16.mxu0 0
    %360 = vmatpush1.bf16.xpose.msra.mxu0 0
    %361 = vmatprep.mubr.bf16.mxu0 0
    %362 = vmatmul.mubr.bf16.gmra.mrb[0].mxu0 %v324
    %v363 = vpop.f32.mrb[0].mxu0
    %v364 = vadd.f32 0.0, %v363
    %v365 = vpop.f32.mrb[0].mxu0
    %v366 = vpop.f32.mrb[0].mxu0
    %v367 = vadd.f32 0.0, %v366
    %v368 = vpop.f32.mrb[0].mxu0
    %369 = vdwg.mxu0
    %v370 = vmul.f32 %v364, 0.25
    %v371 = vmul.f32 %v367, 0.25
    %v372 = vadd.f32 %v370, %v153
    %v373 = vadd.f32 %v371, %v154
    %v374 = vsel %vm322, %v372, -inf
    %375 = vmax.xlane.f32.xlu0 %v374
    %v376 = vpop.xlane.xlu0 %375
    %v377 = vsel %vm322, %v373, -inf
    %378 = vmax.xlane.f32.xlu0 %v377
    %v379 = vpop.xlane.xlu0 %378
    %v380 = vsub.f32 %v372, %v376
    %v381 = vsub.f32 %v373, %v379
    %v382 = vmul.f32 %v380, 1.442695
    %v383 = vpow.pop %v382
    %v384 = vmul.f32 %v381, 1.442695
    %v385 = vpow.pop %v384
    %v386 = vsel %vm322, %v383, 0.0
    %387 = vadd.xlane.f32.xlu0 %v386
    %v388 = vpop.xlane.xlu0 %387
    %v389 = vsel %vm322, %v385, 0.0
    %390 = vadd.xlane.f32.xlu0 %v389
    %v391 = vpop.xlane.xlu0 %390
    %v392 = vrcp.pop %v388
    %v393 = vrcp.pop %v391
    %v394 = vmul.f32 %v383, %v392
    %v395 = vmul.f32 %v385, %v393
    %v396 = vpack.c.bf16 %v395, %v394
    %398 = vrot.lane.b32.xlu0 %v243, 64
    %v399 = vpop.permute.xlu0 %398
    %v402 = vsel %vm322, %v396, 0
    %404 = vmatprep.subr.bf16.mxu0 0
    %405 = vmatpush1.bf16.msra.mxu0 %v399
    %406 = vmatprep.subr.bf16.mxu0 0
    %407 = vmatpush1.bf16.msra.mxu0 0
    %408 = vmatprep.subr.bf16.mxu0 0
    %409 = vmatpush1.bf16.msra.mxu0 0
    %410 = vmatprep.subr.bf16.mxu0 0
    %411 = vmatpush1.bf16.msra.mxu0 0
    %412 = vmatprep.subr.bf16.mxu0 0
    %413 = vmatpush1.bf16.msra.mxu0 0
    %414 = vmatprep.subr.bf16.mxu0 0
    %415 = vmatpush1.bf16.msra.mxu0 0
    %416 = vmatprep.subr.bf16.mxu0 0
    %417 = vmatpush1.bf16.msra.mxu0 0
    %418 = vmatprep.subr.bf16.mxu0 0
    %419 = vmatpush1.bf16.msra.mxu0 0
    %420 = vmatprep.subr.bf16.mxu0 0
    %421 = vmatpush1.bf16.msra.mxu0 0
    %422 = vmatprep.subr.bf16.mxu0 0
    %423 = vmatpush1.bf16.msra.mxu0 0
    %424 = vmatprep.subr.bf16.mxu0 0
    %425 = vmatpush1.bf16.msra.mxu0 0
    %426 = vmatprep.subr.bf16.mxu0 0
    %427 = vmatpush1.bf16.msra.mxu0 0
    %428 = vmatprep.subr.bf16.mxu0 0
    %429 = vmatpush1.bf16.msra.mxu0 0
    %430 = vmatprep.subr.bf16.mxu0 0
    %431 = vmatpush1.bf16.msra.mxu0 0
    %432 = vmatprep.subr.bf16.mxu0 0
    %433 = vmatpush1.bf16.msra.mxu0 0
    %434 = vmatprep.subr.bf16.mxu0 0
    %435 = vmatpush1.bf16.msra.mxu0 0
    %436 = vmatprep.mubr.bf16.mxu0 0
    %437 = vmatmul.mubr.bf16.gmra.mrb[0].mxu0 %v402
    %v438 = vpop.f32.mrb[0].mxu0
    %v439 = vadd.f32 0.0, %v438
    %v440 = vpop.f32.mrb[0].mxu0
    %v441 = vpop.f32.mrb[0].mxu0
    %v442 = vadd.f32 0.0, %v441
    %v443 = vpop.f32.mrb[0].mxu0
    %444 = vdwg.mxu0
    %445 = vrot.lane.b32.xlu0 %v318, 112
    %v446 = vpop.permute.xlu0 %445
    %447 = vrot.lane.b32.xlu0 %v318, 80
    %v448 = vpop.permute.xlu0 %447
    %v450 = vsel %vm322, %v446, 0
    %v453 = vsel %vm322, %v448, 0
    %455 = vmatprep.subr.bf16.mxu0 0
    %456 = vmatpush1.bf16.xpose.msra.mxu0 %v453
    %457 = vmatprep.subr.bf16.mxu0 0
    %458 = vmatpush1.bf16.xpose.msra.mxu0 0
    %459 = vmatprep.subr.bf16.mxu0 0
    %460 = vmatpush1.bf16.xpose.msra.mxu0 0
    %461 = vmatprep.subr.bf16.mxu0 0
    %462 = vmatpush1.bf16.xpose.msra.mxu0 0
    %463 = vmatprep.subr.bf16.mxu0 0
    %464 = vmatpush1.bf16.xpose.msra.mxu0 0
    %465 = vmatprep.subr.bf16.mxu0 0
    %466 = vmatpush1.bf16.xpose.msra.mxu0 0
    %467 = vmatprep.subr.bf16.mxu0 0
    %468 = vmatpush1.bf16.xpose.msra.mxu0 0
    %469 = vmatprep.subr.bf16.mxu0 0
    %470 = vmatpush1.bf16.xpose.msra.mxu0 0
    %471 = vmatprep.subr.bf16.mxu0 0
    %472 = vmatpush1.bf16.xpose.msra.mxu0 0
    %473 = vmatprep.subr.bf16.mxu0 0
    %474 = vmatpush1.bf16.xpose.msra.mxu0 0
    %475 = vmatprep.subr.bf16.mxu0 0
    %476 = vmatpush1.bf16.xpose.msra.mxu0 0
    %477 = vmatprep.subr.bf16.mxu0 0
    %478 = vmatpush1.bf16.xpose.msra.mxu0 0
    %479 = vmatprep.subr.bf16.mxu0 0
    %480 = vmatpush1.bf16.xpose.msra.mxu0 0
    %481 = vmatprep.subr.bf16.mxu0 0
    %482 = vmatpush1.bf16.xpose.msra.mxu0 0
    %483 = vmatprep.subr.bf16.mxu0 0
    %484 = vmatpush1.bf16.xpose.msra.mxu0 0
    %485 = vmatprep.subr.bf16.mxu0 0
    %486 = vmatpush1.bf16.xpose.msra.mxu0 0
    %487 = vmatprep.mubr.bf16.mxu0 0
    %488 = vmatmul.mubr.bf16.gmra.mrb[0].mxu0 %v450
    %v489 = vpop.f32.mrb[0].mxu0
    %v490 = vadd.f32 0.0, %v489
    %v491 = vpop.f32.mrb[0].mxu0
    %v492 = vpop.f32.mrb[0].mxu0
    %v493 = vadd.f32 0.0, %v492
    %v494 = vpop.f32.mrb[0].mxu0
    %495 = vdwg.mxu0
    %v496 = vmul.f32 %v490, 0.25
    %v497 = vmul.f32 %v493, 0.25
    %v498 = vadd.f32 %v496, %v153
    %v499 = vadd.f32 %v497, %v154
    %v500 = vsel %vm322, %v498, -inf
    %501 = vmax.xlane.f32.xlu0 %v500
    %v502 = vpop.xlane.xlu0 %501
    %v503 = vsel %vm322, %v499, -inf
    %504 = vmax.xlane.f32.xlu0 %v503
    %v505 = vpop.xlane.xlu0 %504
    %v506 = vsub.f32 %v498, %v502
    %v507 = vsub.f32 %v499, %v505
    %v508 = vmul.f32 %v506, 1.442695
    %v509 = vpow.pop %v508
    %v510 = vmul.f32 %v507, 1.442695
    %v511 = vpow.pop %v510
    %v512 = vsel %vm322, %v509, 0.0
    %513 = vadd.xlane.f32.xlu0 %v512
    %v514 = vpop.xlane.xlu0 %513
    %v515 = vsel %vm322, %v511, 0.0
    %516 = vadd.xlane.f32.xlu0 %v515
    %v517 = vpop.xlane.xlu0 %516
    %v518 = vrcp.pop %v514
    %v519 = vrcp.pop %v517
    %v520 = vmul.f32 %v509, %v518
    %v521 = vmul.f32 %v511, %v519
    %v522 = vpack.c.bf16 %v521, %v520
    %523 = vrot.lane.b32.xlu0 %v243, 48
    %v524 = vpop.permute.xlu0 %523
    %v527 = vsel %vm322, %v522, 0
    %529 = vmatprep.subr.bf16.mxu0 0
    %530 = vmatpush1.bf16.msra.mxu0 %v524
    %531 = vmatprep.subr.bf16.mxu0 0
    %532 = vmatpush1.bf16.msra.mxu0 0
    %533 = vmatprep.subr.bf16.mxu0 0
    %534 = vmatpush1.bf16.msra.mxu0 0
    %535 = vmatprep.subr.bf16.mxu0 0
    %536 = vmatpush1.bf16.msra.mxu0 0
    %537 = vmatprep.subr.bf16.mxu0 0
    %538 = vmatpush1.bf16.msra.mxu0 0
    %539 = vmatprep.subr.bf16.mxu0 0
    %540 = vmatpush1.bf16.msra.mxu0 0
    %541 = vmatprep.subr.bf16.mxu0 0
    %542 = vmatpush1.bf16.msra.mxu0 0
    %543 = vmatprep.subr.bf16.mxu0 0
    %544 = vmatpush1.bf16.msra.mxu0 0
    %545 = vmatprep.subr.bf16.mxu0 0
    %546 = vmatpush1.bf16.msra.mxu0 0
    %547 = vmatprep.subr.bf16.mxu0 0
    %548 = vmatpush1.bf16.msra.mxu0 0
    %549 = vmatprep.subr.bf16.mxu0 0
    %550 = vmatpush1.bf16.msra.mxu0 0
    %551 = vmatprep.subr.bf16.mxu0 0
    %552 = vmatpush1.bf16.msra.mxu0 0
    %553 = vmatprep.subr.bf16.mxu0 0
    %554 = vmatpush1.bf16.msra.mxu0 0
    %555 = vmatprep.subr.bf16.mxu0 0
    %556 = vmatpush1.bf16.msra.mxu0 0
    %557 = vmatprep.subr.bf16.mxu0 0
    %558 = vmatpush1.bf16.msra.mxu0 0
    %559 = vmatprep.subr.bf16.mxu0 0
    %560 = vmatpush1.bf16.msra.mxu0 0
    %561 = vmatprep.mubr.bf16.mxu0 0
    %562 = vmatmul.mubr.bf16.gmra.mrb[0].mxu0 %v527
    %v563 = vpop.f32.mrb[0].mxu0
    %v564 = vadd.f32 0.0, %v563
    %v565 = vpop.f32.mrb[0].mxu0
    %v566 = vpop.f32.mrb[0].mxu0
    %v567 = vadd.f32 0.0, %v566
    %v568 = vpop.f32.mrb[0].mxu0
    %569 = vdwg.mxu0
    %572 = vrot.lane.b32.xlu0 %v564, 16
    %v573 = vpop.permute.xlu0 %572
    %574 = vrot.lane.b32.xlu0 %v567, 16
    %v575 = vpop.permute.xlu0 %574
    %v578 = vsel %vm322, %v439, %v573
    %v579 = vsel %vm322, %v442, %v575
    %v580 = vpack.c.bf16 %v579, %v578
    %v581 = vld [vmem:[%s8] sm:$0xf]
    %v582 = vld [vmem:[%s8 + $0x4] sm:$0xf]
    %v583 = vld [vmem:[%s8 + $0x8] sm:$0xf]
    %v584 = vld [vmem:[%s8 + $0xc] sm:$0xf]
    %v589 = vunpack.c.l.b16 %v581
    %v590 = vunpack.c.l.b16 %v582
    %v591 = vunpack.c.l.b16 %v583
    %v592 = vunpack.c.l.b16 %v584
    %v593 = vpack.c.b16 %v590, %v589
    %v594 = vpack.c.b16 %v592, %v591
    %v598 = vsel %vm158, %v580, 0
    %600 = vmatprep.subr.bf16.mxu0 0
    %601 = vmatpush1.bf16.msra.mxu0 %v593
    %602 = vmatprep.subr.bf16.mxu0 0
    %603 = vmatpush1.bf16.msra.mxu0 %v594
    %604 = vmatprep.subr.bf16.mxu0 0
    %605 = vmatpush1.bf16.msra.mxu0 0
    %606 = vmatprep.subr.bf16.mxu0 0
    %607 = vmatpush1.bf16.msra.mxu0 0
    %608 = vmatprep.subr.bf16.mxu0 0
    %609 = vmatpush1.bf16.msra.mxu0 0
    %610 = vmatprep.subr.bf16.mxu0 0
    %611 = vmatpush1.bf16.msra.mxu0 0
    %612 = vmatprep.subr.bf16.mxu0 0
    %613 = vmatpush1.bf16.msra.mxu0 0
    %614 = vmatprep.subr.bf16.mxu0 0
    %615 = vmatpush1.bf16.msra.mxu0 0
    %616 = vmatprep.subr.bf16.mxu0 0
    %617 = vmatpush1.bf16.msra.mxu0 0
    %618 = vmatprep.subr.bf16.mxu0 0
    %619 = vmatpush1.bf16.msra.mxu0 0
    %620 = vmatprep.subr.bf16.mxu0 0
    %621 = vmatpush1.bf16.msra.mxu0 0
    %622 = vmatprep.subr.bf16.mxu0 0
    %623 = vmatpush1.bf16.msra.mxu0 0
    %624 = vmatprep.subr.bf16.mxu0 0
    %625 = vmatpush1.bf16.msra.mxu0 0
    %626 = vmatprep.subr.bf16.mxu0 0
    %627 = vmatpush1.bf16.msra.mxu0 0
    %628 = vmatprep.subr.bf16.mxu0 0
    %629 = vmatpush1.bf16.msra.mxu0 0
    %630 = vmatprep.subr.bf16.mxu0 0
    %631 = vmatpush1.bf16.msra.mxu0 0
    %632 = vmatprep.mubr.bf16.mxu0 0
    %633 = vmatmul.mubr.bf16.gmra.mrb[0].mxu0 %v598
    %v634 = vpop.f32.mrb[0].mxu0
    %v635 = vadd.f32 0.0, %v634
    %v636 = vpop.f32.mrb[0].mxu0
    %v637 = vpop.f32.mrb[0].mxu0
    %v638 = vadd.f32 0.0, %v637
    %v639 = vpop.f32.mrb[0].mxu0
    %640 = vdwg.mxu0
    %v641 = vadd.f32 %v135, %v635
    %v642 = vadd.f32 %v138, %v638
    %v643 = vld [vmem:[%s9] sm:$0x1]
    %v644 = vmul.f32 %v641, %v641
    %v645 = vmul.f32 %v642, %v642
    %v646 = vsel %vm158, %v644, 0.0
    %647 = vadd.xlane.f32.xlu0 %v646
    %v648 = vpop.xlane.xlu0 %647
    %v649 = vsel %vm158, %v645, 0.0
    %650 = vadd.xlane.f32.xlu0 %v649
    %v651 = vpop.xlane.xlu0 %650
    %v652 = vmul.f32 %v648, %v165
    %v653 = vmul.f32 %v651, %v165
    %v654 = vadd.f32 %v652, 1e-06
    %v655 = vadd.f32 %v653, 1e-06
    %v656 = vrsqrt.pop %v654
    %v657 = vrsqrt.pop %v655
    %v658 = vmul.f32 %v641, %v656
    %v659 = vmul.f32 %v642, %v657
    %v661 = vlaneseq
    %v662 = vshrl.u32 %v661, 7
    %v663 = vsub.s32 0, %v662
    %v664 = vrot.slane %v643, %v663
    %v666 = vmul.f32 %v658, %v664
    %v667 = vmul.f32 %v659, %v664
    %v668 = vpack.c.bf16 %v667, %v666
    %v669 = vld [vmem:[%s10] sm:$0xf]
    %v670 = vld [vmem:[%s10 + $0x4] sm:$0xf]
    %v671 = vld [vmem:[%s10 + $0x8] sm:$0xf]
    %v672 = vld [vmem:[%s10 + $0xc] sm:$0xf]
    %v677 = vunpack.c.l.b16 %v669
    %v678 = vunpack.c.l.b16 %v670
    %v679 = vunpack.c.l.b16 %v671
    %v680 = vunpack.c.l.b16 %v672
    %v681 = vpack.c.b16 %v678, %v677
    %v682 = vpack.c.b16 %v680, %v679
    %v686 = vsel %vm158, %v668, 0
    %688 = vmatprep.subr.bf16.mxu0 0
    %689 = vmatpush1.bf16.msra.mxu0 %v681
    %690 = vmatprep.subr.bf16.mxu0 0
    %691 = vmatpush1.bf16.msra.mxu0 %v682
    %692 = vmatprep.subr.bf16.mxu0 0
    %693 = vmatpush1.bf16.msra.mxu0 0
    %694 = vmatprep.subr.bf16.mxu0 0
    %695 = vmatpush1.bf16.msra.mxu0 0
    %696 = vmatprep.subr.bf16.mxu0 0
    %697 = vmatpush1.bf16.msra.mxu0 0
    %698 = vmatprep.subr.bf16.mxu0 0
    %699 = vmatpush1.bf16.msra.mxu0 0
    %700 = vmatprep.subr.bf16.mxu0 0
    %701 = vmatpush1.bf16.msra.mxu0 0
    %702 = vmatprep.subr.bf16.mxu0 0
    %703 = vmatpush1.bf16.msra.mxu0 0
    %704 = vmatprep.subr.bf16.mxu0 0
    %705 = vmatpush1.bf16.msra.mxu0 0
    %706 = vmatprep.subr.bf16.mxu0 0
    %707 = vmatpush1.bf16.msra.mxu0 0
    %708 = vmatprep.subr.bf16.mxu0 0
    %709 = vmatpush1.bf16.msra.mxu0 0
    %710 = vmatprep.subr.bf16.mxu0 0
    %711 = vmatpush1.bf16.msra.mxu0 0
    %712 = vmatprep.subr.bf16.mxu0 0
    %713 = vmatpush1.bf16.msra.mxu0 0
    %714 = vmatprep.subr.bf16.mxu0 0
    %715 = vmatpush1.bf16.msra.mxu0 0
    %716 = vmatprep.subr.bf16.mxu0 0
    %717 = vmatpush1.bf16.msra.mxu0 0
    %718 = vmatprep.subr.bf16.mxu0 0
    %719 = vmatpush1.bf16.msra.mxu0 0
    %720 = vmatprep.mubr.bf16.mxu0 0
    %721 = vmatmul.mubr.bf16.gmra.mrb[0].mxu0 %v686
    %v722 = vpop.f32.mrb[0].mxu0
    %v723 = vadd.f32 0.0, %v722
    %v724 = vpop.f32.mrb[0].mxu0
    %v725 = vpop.f32.mrb[0].mxu0
    %v726 = vadd.f32 0.0, %v725
    %v727 = vpop.f32.mrb[0].mxu0
    %728 = vdwg.mxu0
    %v729 = vxor.u32 %v723, 2147483648
    %v730 = vxor.u32 %v726, 2147483648
    %v731 = vmul.f32 %v729, 1.442695
    %v732 = vpow.pop %v731
    %v733 = vmul.f32 %v730, 1.442695
    %v734 = vpow.pop %v733
    %v735 = vadd.f32 %v732, 1.0
    %v736 = vadd.f32 %v734, 1.0
    %v737 = vrcp.pop %v735
    %v738 = vmul.f32 1.0, %v737
    %v739 = vrcp.pop %v736
    %v740 = vmul.f32 1.0, %v739
    %v741 = vmul.f32 %v723, %v738
    %v742 = vmul.f32 %v726, %v740
    %745 = vrot.lane.b32.xlu0 %v723, 64
    %v746 = vpop.permute.xlu0 %745
    %747 = vrot.lane.b32.xlu0 %v726, 64
    %v748 = vpop.permute.xlu0 %747
    %v751 = vmul.f32 %v741, %v746
    %v752 = vmul.f32 %v742, %v748
    %v753 = vpack.c.bf16 %v752, %v751
    %v754 = vld [vmem:[%s11] sm:$0xf]
    %v755 = vld [vmem:[%s11 + $0x4] sm:$0xf]
    %v756 = vld [vmem:[%s11 + $0x8] sm:$0xf]
    %v757 = vld [vmem:[%s11 + $0xc] sm:$0xf]
    %v758 = vld [vmem:[%s11 + $0x10] sm:$0xf]
    %v759 = vld [vmem:[%s11 + $0x14] sm:$0xf]
    %v760 = vld [vmem:[%s11 + $0x18] sm:$0xf]
    %v761 = vld [vmem:[%s11 + $0x1c] sm:$0xf]
    %v770 = vunpack.c.l.b16 %v754
    %v771 = vunpack.c.l.b16 %v755
    %v772 = vunpack.c.l.b16 %v756
    %v773 = vunpack.c.l.b16 %v757
    %v774 = vunpack.c.l.b16 %v758
    %v775 = vunpack.c.l.b16 %v759
    %v776 = vunpack.c.l.b16 %v760
    %v777 = vunpack.c.l.b16 %v761
    %v778 = vpack.c.b16 %v771, %v770
    %v779 = vpack.c.b16 %v773, %v772
    %v780 = vpack.c.b16 %v775, %v774
    %v781 = vpack.c.b16 %v777, %v776
    %v787 = vsel %vm96, %v753, 0
    %789 = vmatprep.subr.bf16.mxu0 0
    %790 = vmatpush1.bf16.msra.mxu0 %v778
    %791 = vmatprep.subr.bf16.mxu0 0
    %792 = vmatpush1.bf16.msra.mxu0 %v779
    %793 = vmatprep.subr.bf16.mxu0 0
    %794 = vmatpush1.bf16.msra.mxu0 %v780
    %795 = vmatprep.subr.bf16.mxu0 0
    %796 = vmatpush1.bf16.msra.mxu0 %v781
    %797 = vmatprep.subr.bf16.mxu0 0
    %798 = vmatpush1.bf16.msra.mxu0 0
    %799 = vmatprep.subr.bf16.mxu0 0
    %800 = vmatpush1.bf16.msra.mxu0 0
    %801 = vmatprep.subr.bf16.mxu0 0
    %802 = vmatpush1.bf16.msra.mxu0 0
    %803 = vmatprep.subr.bf16.mxu0 0
    %804 = vmatpush1.bf16.msra.mxu0 0
    %805 = vmatprep.subr.bf16.mxu0 0
    %806 = vmatpush1.bf16.msra.mxu0 0
    %807 = vmatprep.subr.bf16.mxu0 0
    %808 = vmatpush1.bf16.msra.mxu0 0
    %809 = vmatprep.subr.bf16.mxu0 0
    %810 = vmatpush1.bf16.msra.mxu0 0
    %811 = vmatprep.subr.bf16.mxu0 0
    %812 = vmatpush1.bf16.msra.mxu0 0
    %813 = vmatprep.subr.bf16.mxu0 0
    %814 = vmatpush1.bf16.msra.mxu0 0
    %815 = vmatprep.subr.bf16.mxu0 0
    %816 = vmatpush1.bf16.msra.mxu0 0
    %817 = vmatprep.subr.bf16.mxu0 0
    %818 = vmatpush1.bf16.msra.mxu0 0
    %819 = vmatprep.subr.bf16.mxu0 0
    %820 = vmatpush1.bf16.msra.mxu0 0
    %821 = vmatprep.mubr.bf16.mxu0 0
    %822 = vmatmul.mubr.bf16.gmra.mrb[0].mxu0 %v787
    %v823 = vpop.f32.mrb[0].mxu0
    %v824 = vadd.f32 0.0, %v823
    %v825 = vpop.f32.mrb[0].mxu0
    %v826 = vpop.f32.mrb[0].mxu0
    %v827 = vadd.f32 0.0, %v826
    %v828 = vpop.f32.mrb[0].mxu0
    %829 = vdwg.mxu0
    %v830 = vadd.f32 %v641, %v824
    %v831 = vadd.f32 %v642, %v827
    %s832 = scalar_lea.vmem %s6, 1
    %v833 = vld [vmem:[%s832] sm:$0x1]
    %v834 = vmul.f32 %v830, %v830
    %v835 = vmul.f32 %v831, %v831
    %v836 = vsel %vm158, %v834, 0.0
    %837 = vadd.xlane.f32.xlu0 %v836
    %v838 = vpop.xlane.xlu0 %837
    %v839 = vsel %vm158, %v835, 0.0
    %840 = vadd.xlane.f32.xlu0 %v839
    %v841 = vpop.xlane.xlu0 %840
    %v842 = vmul.f32 %v838, %v165
    %v843 = vmul.f32 %v841, %v165
    %v844 = vadd.f32 %v842, 1e-06
    %v845 = vadd.f32 %v843, 1e-06
    %v846 = vrsqrt.pop %v844
    %v847 = vrsqrt.pop %v845
    %v848 = vmul.f32 %v830, %v846
    %v849 = vmul.f32 %v831, %v847
    %v851 = vlaneseq
    %v852 = vshrl.u32 %v851, 7
    %v853 = vsub.s32 0, %v852
    %v854 = vrot.slane %v833, %v853
    %v856 = vmul.f32 %v848, %v854
    %v857 = vmul.f32 %v849, %v854
    %v858 = vpack.c.bf16 %v857, %v856
    %s859 = scalar_lea.vmem %s7, 16
    %v860 = vld [vmem:[%s859] sm:$0xf]
    %v861 = vld [vmem:[%s859 + $0x4] sm:$0xf]
    %v862 = vld [vmem:[%s859 + $0x8] sm:$0xf]
    %v863 = vld [vmem:[%s859 + $0xc] sm:$0xf]
    %v868 = vunpack.c.l.b16 %v860
    %v869 = vunpack.c.l.b16 %v861
    %v870 = vunpack.c.l.b16 %v862
    %v871 = vunpack.c.l.b16 %v863
    %v872 = vpack.c.b16 %v869, %v868
    %v873 = vpack.c.b16 %v871, %v870
    %v877 = vsel %vm158, %v858, 0
    %879 = vmatprep.subr.bf16.mxu0 0
    %880 = vmatpush1.bf16.msra.mxu0 %v872
    %881 = vmatprep.subr.bf16.mxu0 0
    %882 = vmatpush1.bf16.msra.mxu0 %v873
    %883 = vmatprep.subr.bf16.mxu0 0
    %884 = vmatpush1.bf16.msra.mxu0 0
    %885 = vmatprep.subr.bf16.mxu0 0
    %886 = vmatpush1.bf16.msra.mxu0 0
    %887 = vmatprep.subr.bf16.mxu0 0
    %888 = vmatpush1.bf16.msra.mxu0 0
    %889 = vmatprep.subr.bf16.mxu0 0
    %890 = vmatpush1.bf16.msra.mxu0 0
    %891 = vmatprep.subr.bf16.mxu0 0
    %892 = vmatpush1.bf16.msra.mxu0 0
    %893 = vmatprep.subr.bf16.mxu0 0
    %894 = vmatpush1.bf16.msra.mxu0 0
    %895 = vmatprep.subr.bf16.mxu0 0
    %896 = vmatpush1.bf16.msra.mxu0 0
    %897 = vmatprep.subr.bf16.mxu0 0
    %898 = vmatpush1.bf16.msra.mxu0 0
    %899 = vmatprep.subr.bf16.mxu0 0
    %900 = vmatpush1.bf16.msra.mxu0 0
    %901 = vmatprep.subr.bf16.mxu0 0
    %902 = vmatpush1.bf16.msra.mxu0 0
    %903 = vmatprep.subr.bf16.mxu0 0
    %904 = vmatpush1.bf16.msra.mxu0 0
    %905 = vmatprep.subr.bf16.mxu0 0
    %906 = vmatpush1.bf16.msra.mxu0 0
    %907 = vmatprep.subr.bf16.mxu0 0
    %908 = vmatpush1.bf16.msra.mxu0 0
    %909 = vmatprep.subr.bf16.mxu0 0
    %910 = vmatpush1.bf16.msra.mxu0 0
    %911 = vmatprep.mubr.bf16.mxu0 0
    %912 = vmatmul.mubr.bf16.gmra.mrb[0].mxu0 %v877
    %v913 = vpop.f32.mrb[0].mxu0
    %v914 = vadd.f32 0.0, %v913
    %v915 = vpop.f32.mrb[0].mxu0
    %v916 = vpop.f32.mrb[0].mxu0
    %v917 = vadd.f32 0.0, %v916
    %v918 = vpop.f32.mrb[0].mxu0
    %919 = vdwg.mxu0
    %v920 = vpack.c.bf16 %v917, %v914
    %v922 = vsel %vm96, %v920, 0
    %924 = vmatprep.subr.bf16.mxu0 0
    %925 = vmatpush1.bf16.msra.mxu0 %v260
    %926 = vmatprep.subr.bf16.mxu0 0
    %927 = vmatpush1.bf16.msra.mxu0 %v261
    %928 = vmatprep.subr.bf16.mxu0 0
    %929 = vmatpush1.bf16.msra.mxu0 %v262
    %930 = vmatprep.subr.bf16.mxu0 0
    %931 = vmatpush1.bf16.msra.mxu0 %v263
    %932 = vmatprep.subr.bf16.mxu0 0
    %933 = vmatpush1.bf16.msra.mxu0 0
    %934 = vmatprep.subr.bf16.mxu0 0
    %935 = vmatpush1.bf16.msra.mxu0 0
    %936 = vmatprep.subr.bf16.mxu0 0
    %937 = vmatpush1.bf16.msra.mxu0 0
    %938 = vmatprep.subr.bf16.mxu0 0
    %939 = vmatpush1.bf16.msra.mxu0 0
    %940 = vmatprep.subr.bf16.mxu0 0
    %941 = vmatpush1.bf16.msra.mxu0 0
    %942 = vmatprep.subr.bf16.mxu0 0
    %943 = vmatpush1.bf16.msra.mxu0 0
    %944 = vmatprep.subr.bf16.mxu0 0
    %945 = vmatpush1.bf16.msra.mxu0 0
    %946 = vmatprep.subr.bf16.mxu0 0
    %947 = vmatpush1.bf16.msra.mxu0 0
    %948 = vmatprep.subr.bf16.mxu0 0
    %949 = vmatpush1.bf16.msra.mxu0 0
    %950 = vmatprep.subr.bf16.mxu0 0
    %951 = vmatpush1.bf16.msra.mxu0 0
    %952 = vmatprep.subr.bf16.mxu0 0
    %953 = vmatpush1.bf16.msra.mxu0 0
    %954 = vmatprep.subr.bf16.mxu0 0
    %955 = vmatpush1.bf16.msra.mxu0 0
    %956 = vmatprep.mubr.bf16.mxu0 0
    %957 = vmatmul.mubr.bf16.gmra.mrb[0].mxu0 %v922
    %v958 = vpop.f32.mrb[0].mxu0
    %v959 = vadd.f32 0.0, %v958
    %v960 = vpop.f32.mrb[0].mxu0
    %v961 = vpop.f32.mrb[0].mxu0
    %v962 = vadd.f32 0.0, %v961
    %v963 = vpop.f32.mrb[0].mxu0
    %964 = vdwg.mxu0
    %v965 = vmul.f32 %v914, %v141
    %v966 = vmul.f32 %v917, %v142
    %v967 = vmul.f32 %v959, %v143
    %v968 = vmul.f32 %v962, %v144
    %v969 = vadd.f32 %v965, %v967
    %v970 = vadd.f32 %v966, %v968
    %v971 = vpack.c.bf16 %v970, %v969
    %973 = vrot.lane.b32.xlu0 %v971, 96
    %v974 = vpop.permute.xlu0 %973
    %v976 = vsel %vm322, %v971, 0
    %v979 = vsel %vm322, %v974, 0
    %981 = vmatprep.subr.bf16.mxu0 0
    %982 = vmatpush1.bf16.xpose.msra.mxu0 %v979
    %983 = vmatprep.subr.bf16.mxu0 0
    %984 = vmatpush1.bf16.xpose.msra.mxu0 0
    %985 = vmatprep.subr.bf16.mxu0 0
    %986 = vmatpush1.bf16.xpose.msra.mxu0 0
    %987 = vmatprep.subr.bf16.mxu0 0
    %988 = vmatpush1.bf16.xpose.msra.mxu0 0
    %989 = vmatprep.subr.bf16.mxu0 0
    %990 = vmatpush1.bf16.xpose.msra.mxu0 0
    %991 = vmatprep.subr.bf16.mxu0 0
    %992 = vmatpush1.bf16.xpose.msra.mxu0 0
    %993 = vmatprep.subr.bf16.mxu0 0
    %994 = vmatpush1.bf16.xpose.msra.mxu0 0
    %995 = vmatprep.subr.bf16.mxu0 0
    %996 = vmatpush1.bf16.xpose.msra.mxu0 0
    %997 = vmatprep.subr.bf16.mxu0 0
    %998 = vmatpush1.bf16.xpose.msra.mxu0 0
    %999 = vmatprep.subr.bf16.mxu0 0
    %1000 = vmatpush1.bf16.xpose.msra.mxu0 0
    %1001 = vmatprep.subr.bf16.mxu0 0
    %1002 = vmatpush1.bf16.xpose.msra.mxu0 0
    %1003 = vmatprep.subr.bf16.mxu0 0
    %1004 = vmatpush1.bf16.xpose.msra.mxu0 0
    %1005 = vmatprep.subr.bf16.mxu0 0
    %1006 = vmatpush1.bf16.xpose.msra.mxu0 0
    %1007 = vmatprep.subr.bf16.mxu0 0
    %1008 = vmatpush1.bf16.xpose.msra.mxu0 0
    %1009 = vmatprep.subr.bf16.mxu0 0
    %1010 = vmatpush1.bf16.xpose.msra.mxu0 0
    %1011 = vmatprep.subr.bf16.mxu0 0
    %1012 = vmatpush1.bf16.xpose.msra.mxu0 0
    %1013 = vmatprep.mubr.bf16.mxu0 0
    %1014 = vmatmul.mubr.bf16.gmra.mrb[0].mxu0 %v976
    %v1015 = vpop.f32.mrb[0].mxu0
    %v1016 = vadd.f32 0.0, %v1015
    %v1017 = vpop.f32.mrb[0].mxu0
    %v1018 = vpop.f32.mrb[0].mxu0
    %v1019 = vadd.f32 0.0, %v1018
    %v1020 = vpop.f32.mrb[0].mxu0
    %1021 = vdwg.mxu0
    %v1022 = vmul.f32 %v1016, 0.25
    %v1023 = vmul.f32 %v1019, 0.25
    %v1024 = vadd.f32 %v1022, %v153
    %v1025 = vadd.f32 %v1023, %v154
    %v1026 = vsel %vm322, %v1024, -inf
    %1027 = vmax.xlane.f32.xlu0 %v1026
    %v1028 = vpop.xlane.xlu0 %1027
    %v1029 = vsel %vm322, %v1025, -inf
    %1030 = vmax.xlane.f32.xlu0 %v1029
    %v1031 = vpop.xlane.xlu0 %1030
    %v1032 = vsub.f32 %v1024, %v1028
    %v1033 = vsub.f32 %v1025, %v1031
    %v1034 = vmul.f32 %v1032, 1.442695
    %v1035 = vpow.pop %v1034
    %v1036 = vmul.f32 %v1033, 1.442695
    %v1037 = vpow.pop %v1036
    %v1038 = vsel %vm322, %v1035, 0.0
    %1039 = vadd.xlane.f32.xlu0 %v1038
    %v1040 = vpop.xlane.xlu0 %1039
    %v1041 = vsel %vm322, %v1037, 0.0
    %1042 = vadd.xlane.f32.xlu0 %v1041
    %v1043 = vpop.xlane.xlu0 %1042
    %v1044 = vrcp.pop %v1040
    %v1045 = vrcp.pop %v1043
    %v1046 = vmul.f32 %v1035, %v1044
    %v1047 = vmul.f32 %v1037, %v1045
    %v1048 = vpack.c.bf16 %v1047, %v1046
    %1050 = vrot.lane.b32.xlu0 %v920, 64
    %v1051 = vpop.permute.xlu0 %1050
    %v1054 = vsel %vm322, %v1048, 0
    %1056 = vmatprep.subr.bf16.mxu0 0
    %1057 = vmatpush1.bf16.msra.mxu0 %v1051
    %1058 = vmatprep.subr.bf16.mxu0 0
    %1059 = vmatpush1.bf16.msra.mxu0 0
    %1060 = vmatprep.subr.bf16.mxu0 0
    %1061 = vmatpush1.bf16.msra.mxu0 0
    %1062 = vmatprep.subr.bf16.mxu0 0
    %1063 = vmatpush1.bf16.msra.mxu0 0
    %1064 = vmatprep.subr.bf16.mxu0 0
    %1065 = vmatpush1.bf16.msra.mxu0 0
    %1066 = vmatprep.subr.bf16.mxu0 0
    %1067 = vmatpush1.bf16.msra.mxu0 0
    %1068 = vmatprep.subr.bf16.mxu0 0
    %1069 = vmatpush1.bf16.msra.mxu0 0
    %1070 = vmatprep.subr.bf16.mxu0 0
    %1071 = vmatpush1.bf16.msra.mxu0 0
    %1072 = vmatprep.subr.bf16.mxu0 0
    %1073 = vmatpush1.bf16.msra.mxu0 0
    %1074 = vmatprep.subr.bf16.mxu0 0
    %1075 = vmatpush1.bf16.msra.mxu0 0
    %1076 = vmatprep.subr.bf16.mxu0 0
    %1077 = vmatpush1.bf16.msra.mxu0 0
    %1078 = vmatprep.subr.bf16.mxu0 0
    %1079 = vmatpush1.bf16.msra.mxu0 0
    %1080 = vmatprep.subr.bf16.mxu0 0
    %1081 = vmatpush1.bf16.msra.mxu0 0
    %1082 = vmatprep.subr.bf16.mxu0 0
    %1083 = vmatpush1.bf16.msra.mxu0 0
    %1084 = vmatprep.subr.bf16.mxu0 0
    %1085 = vmatpush1.bf16.msra.mxu0 0
    %1086 = vmatprep.subr.bf16.mxu0 0
    %1087 = vmatpush1.bf16.msra.mxu0 0
    %1088 = vmatprep.mubr.bf16.mxu0 0
    %1089 = vmatmul.mubr.bf16.gmra.mrb[0].mxu0 %v1054
    %v1090 = vpop.f32.mrb[0].mxu0
    %v1091 = vadd.f32 0.0, %v1090
    %v1092 = vpop.f32.mrb[0].mxu0
    %v1093 = vpop.f32.mrb[0].mxu0
    %v1094 = vadd.f32 0.0, %v1093
    %v1095 = vpop.f32.mrb[0].mxu0
    %1096 = vdwg.mxu0
    %1097 = vrot.lane.b32.xlu0 %v971, 112
    %v1098 = vpop.permute.xlu0 %1097
    %1099 = vrot.lane.b32.xlu0 %v971, 80
    %v1100 = vpop.permute.xlu0 %1099
    %v1102 = vsel %vm322, %v1098, 0
    %v1105 = vsel %vm322, %v1100, 0
    %1107 = vmatprep.subr.bf16.mxu0 0
    %1108 = vmatpush1.bf16.xpose.msra.mxu0 %v1105
    %1109 = vmatprep.subr.bf16.mxu0 0
    %1110 = vmatpush1.bf16.xpose.msra.mxu0 0
    %1111 = vmatprep.subr.bf16.mxu0 0
    %1112 = vmatpush1.bf16.xpose.msra.mxu0 0
    %1113 = vmatprep.subr.bf16.mxu0 0
    %1114 = vmatpush1.bf16.xpose.msra.mxu0 0
    %1115 = vmatprep.subr.bf16.mxu0 0
    %1116 = vmatpush1.bf16.xpose.msra.mxu0 0
    %1117 = vmatprep.subr.bf16.mxu0 0
    %1118 = vmatpush1.bf16.xpose.msra.mxu0 0
    %1119 = vmatprep.subr.bf16.mxu0 0
    %1120 = vmatpush1.bf16.xpose.msra.mxu0 0
    %1121 = vmatprep.subr.bf16.mxu0 0
    %1122 = vmatpush1.bf16.xpose.msra.mxu0 0
    %1123 = vmatprep.subr.bf16.mxu0 0
    %1124 = vmatpush1.bf16.xpose.msra.mxu0 0
    %1125 = vmatprep.subr.bf16.mxu0 0
    %1126 = vmatpush1.bf16.xpose.msra.mxu0 0
    %1127 = vmatprep.subr.bf16.mxu0 0
    %1128 = vmatpush1.bf16.xpose.msra.mxu0 0
    %1129 = vmatprep.subr.bf16.mxu0 0
    %1130 = vmatpush1.bf16.xpose.msra.mxu0 0
    %1131 = vmatprep.subr.bf16.mxu0 0
    %1132 = vmatpush1.bf16.xpose.msra.mxu0 0
    %1133 = vmatprep.subr.bf16.mxu0 0
    %1134 = vmatpush1.bf16.xpose.msra.mxu0 0
    %1135 = vmatprep.subr.bf16.mxu0 0
    %1136 = vmatpush1.bf16.xpose.msra.mxu0 0
    %1137 = vmatprep.subr.bf16.mxu0 0
    %1138 = vmatpush1.bf16.xpose.msra.mxu0 0
    %1139 = vmatprep.mubr.bf16.mxu0 0
    %1140 = vmatmul.mubr.bf16.gmra.mrb[0].mxu0 %v1102
    %v1141 = vpop.f32.mrb[0].mxu0
    %v1142 = vadd.f32 0.0, %v1141
    %v1143 = vpop.f32.mrb[0].mxu0
    %v1144 = vpop.f32.mrb[0].mxu0
    %v1145 = vadd.f32 0.0, %v1144
    %v1146 = vpop.f32.mrb[0].mxu0
    %1147 = vdwg.mxu0
    %v1148 = vmul.f32 %v1142, 0.25
    %v1149 = vmul.f32 %v1145, 0.25
    %v1150 = vadd.f32 %v1148, %v153
    %v1151 = vadd.f32 %v1149, %v154
    %v1152 = vsel %vm322, %v1150, -inf
    %1153 = vmax.xlane.f32.xlu0 %v1152
    %v1154 = vpop.xlane.xlu0 %1153
    %v1155 = vsel %vm322, %v1151, -inf
    %1156 = vmax.xlane.f32.xlu0 %v1155
    %v1157 = vpop.xlane.xlu0 %1156
    %v1158 = vsub.f32 %v1150, %v1154
    %v1159 = vsub.f32 %v1151, %v1157
    %v1160 = vmul.f32 %v1158, 1.442695
    %v1161 = vpow.pop %v1160
    %v1162 = vmul.f32 %v1159, 1.442695
    %v1163 = vpow.pop %v1162
    %v1164 = vsel %vm322, %v1161, 0.0
    %1165 = vadd.xlane.f32.xlu0 %v1164
    %v1166 = vpop.xlane.xlu0 %1165
    %v1167 = vsel %vm322, %v1163, 0.0
    %1168 = vadd.xlane.f32.xlu0 %v1167
    %v1169 = vpop.xlane.xlu0 %1168
    %v1170 = vrcp.pop %v1166
    %v1171 = vrcp.pop %v1169
    %v1172 = vmul.f32 %v1161, %v1170
    %v1173 = vmul.f32 %v1163, %v1171
    %v1174 = vpack.c.bf16 %v1173, %v1172
    %1175 = vrot.lane.b32.xlu0 %v920, 48
    %v1176 = vpop.permute.xlu0 %1175
    %v1179 = vsel %vm322, %v1174, 0
    %1181 = vmatprep.subr.bf16.mxu0 0
    %1182 = vmatpush1.bf16.msra.mxu0 %v1176
    %1183 = vmatprep.subr.bf16.mxu0 0
    %1184 = vmatpush1.bf16.msra.mxu0 0
    %1185 = vmatprep.subr.bf16.mxu0 0
    %1186 = vmatpush1.bf16.msra.mxu0 0
    %1187 = vmatprep.subr.bf16.mxu0 0
    %1188 = vmatpush1.bf16.msra.mxu0 0
    %1189 = vmatprep.subr.bf16.mxu0 0
    %1190 = vmatpush1.bf16.msra.mxu0 0
    %1191 = vmatprep.subr.bf16.mxu0 0
    %1192 = vmatpush1.bf16.msra.mxu0 0
    %1193 = vmatprep.subr.bf16.mxu0 0
    %1194 = vmatpush1.bf16.msra.mxu0 0
    %1195 = vmatprep.subr.bf16.mxu0 0
    %1196 = vmatpush1.bf16.msra.mxu0 0
    %1197 = vmatprep.subr.bf16.mxu0 0
    %1198 = vmatpush1.bf16.msra.mxu0 0
    %1199 = vmatprep.subr.bf16.mxu0 0
    %1200 = vmatpush1.bf16.msra.mxu0 0
    %1201 = vmatprep.subr.bf16.mxu0 0
    %1202 = vmatpush1.bf16.msra.mxu0 0
    %1203 = vmatprep.subr.bf16.mxu0 0
    %1204 = vmatpush1.bf16.msra.mxu0 0
    %1205 = vmatprep.subr.bf16.mxu0 0
    %1206 = vmatpush1.bf16.msra.mxu0 0
    %1207 = vmatprep.subr.bf16.mxu0 0
    %1208 = vmatpush1.bf16.msra.mxu0 0
    %1209 = vmatprep.subr.bf16.mxu0 0
    %1210 = vmatpush1.bf16.msra.mxu0 0
    %1211 = vmatprep.subr.bf16.mxu0 0
    %1212 = vmatpush1.bf16.msra.mxu0 0
    %1213 = vmatprep.mubr.bf16.mxu0 0
    %1214 = vmatmul.mubr.bf16.gmra.mrb[0].mxu0 %v1179
    %v1215 = vpop.f32.mrb[0].mxu0
    %v1216 = vadd.f32 0.0, %v1215
    %v1217 = vpop.f32.mrb[0].mxu0
    %v1218 = vpop.f32.mrb[0].mxu0
    %v1219 = vadd.f32 0.0, %v1218
    %v1220 = vpop.f32.mrb[0].mxu0
    %1221 = vdwg.mxu0
    %1224 = vrot.lane.b32.xlu0 %v1216, 16
    %v1225 = vpop.permute.xlu0 %1224
    %1226 = vrot.lane.b32.xlu0 %v1219, 16
    %v1227 = vpop.permute.xlu0 %1226
    %v1230 = vsel %vm322, %v1091, %v1225
    %v1231 = vsel %vm322, %v1094, %v1227
    %v1232 = vpack.c.bf16 %v1231, %v1230
    %s1233 = scalar_lea.vmem %s8, 16
    %v1234 = vld [vmem:[%s1233] sm:$0xf]
    %v1235 = vld [vmem:[%s1233 + $0x4] sm:$0xf]
    %v1236 = vld [vmem:[%s1233 + $0x8] sm:$0xf]
    %v1237 = vld [vmem:[%s1233 + $0xc] sm:$0xf]
    %v1242 = vunpack.c.l.b16 %v1234
    %v1243 = vunpack.c.l.b16 %v1235
    %v1244 = vunpack.c.l.b16 %v1236
    %v1245 = vunpack.c.l.b16 %v1237
    %v1246 = vpack.c.b16 %v1243, %v1242
    %v1247 = vpack.c.b16 %v1245, %v1244
    %v1251 = vsel %vm158, %v1232, 0
    %1253 = vmatprep.subr.bf16.mxu0 0
    %1254 = vmatpush1.bf16.msra.mxu0 %v1246
    %1255 = vmatprep.subr.bf16.mxu0 0
    %1256 = vmatpush1.bf16.msra.mxu0 %v1247
    %1257 = vmatprep.subr.bf16.mxu0 0
    %1258 = vmatpush1.bf16.msra.mxu0 0
    %1259 = vmatprep.subr.bf16.mxu0 0
    %1260 = vmatpush1.bf16.msra.mxu0 0
    %1261 = vmatprep.subr.bf16.mxu0 0
    %1262 = vmatpush1.bf16.msra.mxu0 0
    %1263 = vmatprep.subr.bf16.mxu0 0
    %1264 = vmatpush1.bf16.msra.mxu0 0
    %1265 = vmatprep.subr.bf16.mxu0 0
    %1266 = vmatpush1.bf16.msra.mxu0 0
    %1267 = vmatprep.subr.bf16.mxu0 0
    %1268 = vmatpush1.bf16.msra.mxu0 0
    %1269 = vmatprep.subr.bf16.mxu0 0
    %1270 = vmatpush1.bf16.msra.mxu0 0
    %1271 = vmatprep.subr.bf16.mxu0 0
    %1272 = vmatpush1.bf16.msra.mxu0 0
    %1273 = vmatprep.subr.bf16.mxu0 0
    %1274 = vmatpush1.bf16.msra.mxu0 0
    %1275 = vmatprep.subr.bf16.mxu0 0
    %1276 = vmatpush1.bf16.msra.mxu0 0
    %1277 = vmatprep.subr.bf16.mxu0 0
    %1278 = vmatpush1.bf16.msra.mxu0 0
    %1279 = vmatprep.subr.bf16.mxu0 0
    %1280 = vmatpush1.bf16.msra.mxu0 0
    %1281 = vmatprep.subr.bf16.mxu0 0
    %1282 = vmatpush1.bf16.msra.mxu0 0
    %1283 = vmatprep.subr.bf16.mxu0 0
    %1284 = vmatpush1.bf16.msra.mxu0 0
    %1285 = vmatprep.mubr.bf16.mxu0 0
    %1286 = vmatmul.mubr.bf16.gmra.mrb[0].mxu0 %v1251
    %v1287 = vpop.f32.mrb[0].mxu0
    %v1288 = vadd.f32 0.0, %v1287
    %v1289 = vpop.f32.mrb[0].mxu0
    %v1290 = vpop.f32.mrb[0].mxu0
    %v1291 = vadd.f32 0.0, %v1290
    %v1292 = vpop.f32.mrb[0].mxu0
    %1293 = vdwg.mxu0
    %v1294 = vadd.f32 %v830, %v1288
    %v1295 = vadd.f32 %v831, %v1291
    %s1296 = scalar_lea.vmem %s9, 1
    %v1297 = vld [vmem:[%s1296] sm:$0x1]
    %v1298 = vmul.f32 %v1294, %v1294
    %v1299 = vmul.f32 %v1295, %v1295
    %v1300 = vsel %vm158, %v1298, 0.0
    %1301 = vadd.xlane.f32.xlu0 %v1300
    %v1302 = vpop.xlane.xlu0 %1301
    %v1303 = vsel %vm158, %v1299, 0.0
    %1304 = vadd.xlane.f32.xlu0 %v1303
    %v1305 = vpop.xlane.xlu0 %1304
    %v1306 = vmul.f32 %v1302, %v165
    %v1307 = vmul.f32 %v1305, %v165
    %v1308 = vadd.f32 %v1306, 1e-06
    %v1309 = vadd.f32 %v1307, 1e-06
    %v1310 = vrsqrt.pop %v1308
    %v1311 = vrsqrt.pop %v1309
    %v1312 = vmul.f32 %v1294, %v1310
    %v1313 = vmul.f32 %v1295, %v1311
    %v1315 = vlaneseq
    %v1316 = vshrl.u32 %v1315, 7
    %v1317 = vsub.s32 0, %v1316
    %v1318 = vrot.slane %v1297, %v1317
    %v1320 = vmul.f32 %v1312, %v1318
    %v1321 = vmul.f32 %v1313, %v1318
    %v1322 = vpack.c.bf16 %v1321, %v1320
    %s1323 = scalar_lea.vmem %s10, 16
    %v1324 = vld [vmem:[%s1323] sm:$0xf]
    %v1325 = vld [vmem:[%s1323 + $0x4] sm:$0xf]
    %v1326 = vld [vmem:[%s1323 + $0x8] sm:$0xf]
    %v1327 = vld [vmem:[%s1323 + $0xc] sm:$0xf]
    %v1332 = vunpack.c.l.b16 %v1324
    %v1333 = vunpack.c.l.b16 %v1325
    %v1334 = vunpack.c.l.b16 %v1326
    %v1335 = vunpack.c.l.b16 %v1327
    %v1336 = vpack.c.b16 %v1333, %v1332
    %v1337 = vpack.c.b16 %v1335, %v1334
    %v1341 = vsel %vm158, %v1322, 0
    %1343 = vmatprep.subr.bf16.mxu0 0
    %1344 = vmatpush1.bf16.msra.mxu0 %v1336
    %1345 = vmatprep.subr.bf16.mxu0 0
    %1346 = vmatpush1.bf16.msra.mxu0 %v1337
    %1347 = vmatprep.subr.bf16.mxu0 0
    %1348 = vmatpush1.bf16.msra.mxu0 0
    %1349 = vmatprep.subr.bf16.mxu0 0
    %1350 = vmatpush1.bf16.msra.mxu0 0
    %1351 = vmatprep.subr.bf16.mxu0 0
    %1352 = vmatpush1.bf16.msra.mxu0 0
    %1353 = vmatprep.subr.bf16.mxu0 0
    %1354 = vmatpush1.bf16.msra.mxu0 0
    %1355 = vmatprep.subr.bf16.mxu0 0
    %1356 = vmatpush1.bf16.msra.mxu0 0
    %1357 = vmatprep.subr.bf16.mxu0 0
    %1358 = vmatpush1.bf16.msra.mxu0 0
    %1359 = vmatprep.subr.bf16.mxu0 0
    %1360 = vmatpush1.bf16.msra.mxu0 0
    %1361 = vmatprep.subr.bf16.mxu0 0
    %1362 = vmatpush1.bf16.msra.mxu0 0
    %1363 = vmatprep.subr.bf16.mxu0 0
    %1364 = vmatpush1.bf16.msra.mxu0 0
    %1365 = vmatprep.subr.bf16.mxu0 0
    %1366 = vmatpush1.bf16.msra.mxu0 0
    %1367 = vmatprep.subr.bf16.mxu0 0
    %1368 = vmatpush1.bf16.msra.mxu0 0
    %1369 = vmatprep.subr.bf16.mxu0 0
    %1370 = vmatpush1.bf16.msra.mxu0 0
    %1371 = vmatprep.subr.bf16.mxu0 0
    %1372 = vmatpush1.bf16.msra.mxu0 0
    %1373 = vmatprep.subr.bf16.mxu0 0
    %1374 = vmatpush1.bf16.msra.mxu0 0
    %1375 = vmatprep.mubr.bf16.mxu0 0
    %1376 = vmatmul.mubr.bf16.gmra.mrb[0].mxu0 %v1341
    %v1377 = vpop.f32.mrb[0].mxu0
    %v1378 = vadd.f32 0.0, %v1377
    %v1379 = vpop.f32.mrb[0].mxu0
    %v1380 = vpop.f32.mrb[0].mxu0
    %v1381 = vadd.f32 0.0, %v1380
    %v1382 = vpop.f32.mrb[0].mxu0
    %1383 = vdwg.mxu0
    %v1384 = vxor.u32 %v1378, 2147483648
    %v1385 = vxor.u32 %v1381, 2147483648
    %v1386 = vmul.f32 %v1384, 1.442695
    %v1387 = vpow.pop %v1386
    %v1388 = vmul.f32 %v1385, 1.442695
    %v1389 = vpow.pop %v1388
    %v1390 = vadd.f32 %v1387, 1.0
    %v1391 = vadd.f32 %v1389, 1.0
    %v1392 = vrcp.pop %v1390
    %v1393 = vmul.f32 1.0, %v1392
    %v1394 = vrcp.pop %v1391
    %v1395 = vmul.f32 1.0, %v1394
    %v1396 = vmul.f32 %v1378, %v1393
    %v1397 = vmul.f32 %v1381, %v1395
    %1400 = vrot.lane.b32.xlu0 %v1378, 64
    %v1401 = vpop.permute.xlu0 %1400
    %1402 = vrot.lane.b32.xlu0 %v1381, 64
    %v1403 = vpop.permute.xlu0 %1402
    %v1406 = vmul.f32 %v1396, %v1401
    %v1407 = vmul.f32 %v1397, %v1403
    %v1408 = vpack.c.bf16 %v1407, %v1406
    %s1409 = scalar_lea.vmem %s11, 32
    %v1410 = vld [vmem:[%s1409] sm:$0xf]
    %v1411 = vld [vmem:[%s1409 + $0x4] sm:$0xf]
    %v1412 = vld [vmem:[%s1409 + $0x8] sm:$0xf]
    %v1413 = vld [vmem:[%s1409 + $0xc] sm:$0xf]
    %v1414 = vld [vmem:[%s1409 + $0x10] sm:$0xf]
    %v1415 = vld [vmem:[%s1409 + $0x14] sm:$0xf]
    %v1416 = vld [vmem:[%s1409 + $0x18] sm:$0xf]
    %v1417 = vld [vmem:[%s1409 + $0x1c] sm:$0xf]
    %v1426 = vunpack.c.l.b16 %v1410
    %v1427 = vunpack.c.l.b16 %v1411
    %v1428 = vunpack.c.l.b16 %v1412
    %v1429 = vunpack.c.l.b16 %v1413
    %v1430 = vunpack.c.l.b16 %v1414
    %v1431 = vunpack.c.l.b16 %v1415
    %v1432 = vunpack.c.l.b16 %v1416
    %v1433 = vunpack.c.l.b16 %v1417
    %v1434 = vpack.c.b16 %v1427, %v1426
    %v1435 = vpack.c.b16 %v1429, %v1428
    %v1436 = vpack.c.b16 %v1431, %v1430
    %v1437 = vpack.c.b16 %v1433, %v1432
    %v1443 = vsel %vm96, %v1408, 0
    %1445 = vmatprep.subr.bf16.mxu0 0
    %1446 = vmatpush1.bf16.msra.mxu0 %v1434
    %1447 = vmatprep.subr.bf16.mxu0 0
    %1448 = vmatpush1.bf16.msra.mxu0 %v1435
    %1449 = vmatprep.subr.bf16.mxu0 0
    %1450 = vmatpush1.bf16.msra.mxu0 %v1436
    %1451 = vmatprep.subr.bf16.mxu0 0
    %1452 = vmatpush1.bf16.msra.mxu0 %v1437
    %1453 = vmatprep.subr.bf16.mxu0 0
    %1454 = vmatpush1.bf16.msra.mxu0 0
    %1455 = vmatprep.subr.bf16.mxu0 0
    %1456 = vmatpush1.bf16.msra.mxu0 0
    %1457 = vmatprep.subr.bf16.mxu0 0
    %1458 = vmatpush1.bf16.msra.mxu0 0
    %1459 = vmatprep.subr.bf16.mxu0 0
    %1460 = vmatpush1.bf16.msra.mxu0 0
    %1461 = vmatprep.subr.bf16.mxu0 0
    %1462 = vmatpush1.bf16.msra.mxu0 0
    %1463 = vmatprep.subr.bf16.mxu0 0
    %1464 = vmatpush1.bf16.msra.mxu0 0
    %1465 = vmatprep.subr.bf16.mxu0 0
    %1466 = vmatpush1.bf16.msra.mxu0 0
    %1467 = vmatprep.subr.bf16.mxu0 0
    %1468 = vmatpush1.bf16.msra.mxu0 0
    %1469 = vmatprep.subr.bf16.mxu0 0
    %1470 = vmatpush1.bf16.msra.mxu0 0
    %1471 = vmatprep.subr.bf16.mxu0 0
    %1472 = vmatpush1.bf16.msra.mxu0 0
    %1473 = vmatprep.subr.bf16.mxu0 0
    %1474 = vmatpush1.bf16.msra.mxu0 0
    %1475 = vmatprep.subr.bf16.mxu0 0
    %1476 = vmatpush1.bf16.msra.mxu0 0
    %1477 = vmatprep.mubr.bf16.mxu0 0
    %1478 = vmatmul.mubr.bf16.gmra.mrb[0].mxu0 %v1443
    %v1479 = vpop.f32.mrb[0].mxu0
    %v1480 = vadd.f32 0.0, %v1479
    %v1481 = vpop.f32.mrb[0].mxu0
    %v1482 = vpop.f32.mrb[0].mxu0
    %v1483 = vadd.f32 0.0, %v1482
    %v1484 = vpop.f32.mrb[0].mxu0
    %1485 = vdwg.mxu0
    %v1486 = vadd.f32 %v1294, %v1480
    %v1487 = vadd.f32 %v1295, %v1483
    %v1489 = vrot.slane %v1486, 7
    %v1492 = vrot.slane %v1487, 6
    %vm1494 = vcmask 1040384
    %v1495 = vsel %vm1494, %v1489, %v1492
    %v1496 = vld [vmem:[%s12] sm:$0x1]
    %v1497 = vmul.f32 %v1495, %v1495
    %vm1498 = vcmask 254976
    %v1499 = vsel %vm1498, %v1497, 0.0
    %1500 = vadd.xlane.f32.xlu0 %v1499
    %v1501 = vpop.xlane.xlu0 %1500
    %v1502 = vmul.f32 %v1501, %v165
    %v1503 = vadd.f32 %v1502, 1e-06
    %v1504 = vrsqrt.pop %v1503
    %v1505 = vmul.f32 %v1495, %v1504
    %v1507 = vlaneseq
    %v1508 = vshrl.u32 %v1507, 7
    %v1509 = vsub.s32 0, %v1508
    %v1510 = vrot.slane %v1496, %v1509
    %v1512 = vmul.f32 %v1505, %v1510
    %v1513 = vpack.c.bf16 %v1512, %v1512
    %v1514 = vld [vmem:[%s13] sm:$0xf]
    %v1515 = vld [vmem:[%s13 + $0x4] sm:$0xf]
    %v1516 = vld [vmem:[%s13 + $0x8] sm:$0xf]
    %v1517 = vld [vmem:[%s13 + $0xc] sm:$0xf]
    %v1522 = vunpack.c.l.b16 %v1514
    %v1523 = vunpack.c.l.b16 %v1515
    %v1524 = vunpack.c.l.b16 %v1516
    %v1525 = vunpack.c.l.b16 %v1517
    %v1526 = vpack.c.b16 %v1523, %v1522
    %v1527 = vpack.c.b16 %v1525, %v1524
    %v1531 = vsel %vm158, %v1513, 0
    %1533 = vmatprep.subr.bf16.mxu0 0
    %1534 = vmatpush1.bf16.msra.mxu0 %v1526
    %1535 = vmatprep.subr.bf16.mxu0 0
    %1536 = vmatpush1.bf16.msra.mxu0 %v1527
    %1537 = vmatprep.subr.bf16.mxu0 0
    %1538 = vmatpush1.bf16.msra.mxu0 0
    %1539 = vmatprep.subr.bf16.mxu0 0
    %1540 = vmatpush1.bf16.msra.mxu0 0
    %1541 = vmatprep.subr.bf16.mxu0 0
    %1542 = vmatpush1.bf16.msra.mxu0 0
    %1543 = vmatprep.subr.bf16.mxu0 0
    %1544 = vmatpush1.bf16.msra.mxu0 0
    %1545 = vmatprep.subr.bf16.mxu0 0
    %1546 = vmatpush1.bf16.msra.mxu0 0
    %1547 = vmatprep.subr.bf16.mxu0 0
    %1548 = vmatpush1.bf16.msra.mxu0 0
    %1549 = vmatprep.subr.bf16.mxu0 0
    %1550 = vmatpush1.bf16.msra.mxu0 0
    %1551 = vmatprep.subr.bf16.mxu0 0
    %1552 = vmatpush1.bf16.msra.mxu0 0
    %1553 = vmatprep.subr.bf16.mxu0 0
    %1554 = vmatpush1.bf16.msra.mxu0 0
    %1555 = vmatprep.subr.bf16.mxu0 0
    %1556 = vmatpush1.bf16.msra.mxu0 0
    %1557 = vmatprep.subr.bf16.mxu0 0
    %1558 = vmatpush1.bf16.msra.mxu0 0
    %1559 = vmatprep.subr.bf16.mxu0 0
    %1560 = vmatpush1.bf16.msra.mxu0 0
    %1561 = vmatprep.subr.bf16.mxu0 0
    %1562 = vmatpush1.bf16.msra.mxu0 0
    %1563 = vmatprep.subr.bf16.mxu0 0
    %1564 = vmatpush1.bf16.msra.mxu0 0
    %1565 = vmatprep.mubr.bf16.mxu0 0
    %1566 = vmatmul.mubr.bf16.gmra.mrb[0].mxu0 %v1531
    %v1567 = vpop.f32.mrb[0].mxu0
    %v1568 = vadd.f32 0.0, %v1567
    %v1569 = vpop.f32.mrb[0].mxu0
    %v1570 = vpop.f32.mrb[0].mxu0
    %v1571 = vpop.f32.mrb[0].mxu0
    %1572 = vdwg.mxu0
    %vm1573 = vcmask 517120
    %1574 = vst.msk [vmem:[#allocation2] sm:$0x3] %vm1573, %v1568
    // Predicated region
    $region58: #{forward.1} parent=1 // pred_check
      _
    $region59: #{forward.1} parent=1 // pred_check_branch
      %1576 = sbr.rel (0) target = $region61
    $region60: #{forward.1} parent=1 // pred_region
      %s1578 = ssub.s32 32, 32
      %1579 = vsyncadd [#allocation3], %s1578
      %s1581 = sshll.u32 [#allocation2], 4
      %s1582 = int_to_ptr.vmem [resolvable:$true] %s1581
      %1584 = dma.vmem_to_hbm [thread:$0]  %s1582, 32, %s14, [#allocation3]
    $region61: #{forward.1} parent=1 // pred_fallthru
      _
    // Predicated region
    $region62: #{forward.1} parent=1 // pred_check
      _
    $region63: #{forward.1} parent=1 // pred_check_branch
      %1586 = sbr.rel (0) target = $region65
    $region64: #{forward.1} parent=1 // pred_region
      %1587 = dma.done [#allocation3], 32
    $region65: #{forward.1} parent=1 // pred_fallthru
      _
    %1588 = vsyncpa [#allocation3], 1

</llo_original>
